<compile_context>
chip_gen: v7x
topology: tpu7x:2x2x1
jax: 0.10.0
libtpu: 0.0.40
codegen_flags: <defaults>
</compile_context>

<pallas_src>
import functools

import jax
import jax.numpy as jnp
import numpy as np
from jax.experimental import pallas as pl
from jax.experimental.pallas import tpu as pltpu

IN_DIM = 512  # Linear(512, ...) in the reference module


def _vae_kernel(x_ref, wenc_ref, benc_ref, w1d_ref, b1_ref, w2_ref, b2_ref,
                out_ref, kl_ref, *, z_dim, batch, tb):
    two_z = 2 * z_dim
    x = x_ref[...]                                                    # (tb, 512) bf16

    # ---- encode: single fused N=2*z_dim matmul -> [mu | logvar] lanes ----
    enc = jnp.dot(x, wenc_ref[...],
                  preferred_element_type=jnp.float32) + benc_ref[...]  # (tb, 2Z) f32

    lane = jax.lax.broadcasted_iota(jnp.int32, (tb, two_z), 1)
    is_mu = lane < z_dim
    # t = [mu | std] with std = exp(logvar).  No sub-vreg lane slices; the exp
    # runs on the EUP slot and the select on the VPU.
    t = jnp.where(is_mu, enc, jnp.exp(enc))                            # (tb, 2Z) f32

    # ---- decode ----
    # z @ w_dec1 == t @ [w_dec1; w_dec1]   (mu @ w + std @ w), K = 2*z_dim.
    h1 = jnp.dot(t.astype(w1d_ref.dtype), w1d_ref[...],
                 preferred_element_type=jnp.float32) + b1_ref[...]     # (tb, 512) f32
    h1 = jnp.maximum(h1, 0.0)
    out = jnp.dot(h1.astype(w2_ref.dtype), w2_ref[...],
                  preferred_element_type=jnp.float32) + b2_ref[...]
    out_ref[...] = out.astype(out_ref.dtype)                           # (tb, 512) bf16

    # ---- KL partial sum for this batch block (final mean in the wrapper) ----
    # mu lanes:     0.5*mu^2  - 0.25
    # logvar lanes: 0.5*std^2 - 0.25 - logvar
    # summing the two lanes of element j gives 0.5*(mu^2 + std^2 - 1) - logvar.
    kl_lane = 0.5 * (t * t) - 0.25 - jnp.where(is_mu, 0.0, enc)
    row = jax.lax.broadcasted_iota(jnp.int32, (tb, 1), 0) + pl.program_id(0) * tb
    kl_sum = jnp.sum(jnp.where(row < batch, kl_lane, 0.0))
    # Lane-dense (1, 128) store: unmasked vst, lane 0 read back in the wrapper.
    kl_ref[...] = jnp.full((1, 128), kl_sum, dtype=jnp.float32)


def _batch_tiling(b):
    """Return (tb, n_blocks, b_pad): 8-aligned batch tile (cap 1024), >=2 grid
    blocks when the batch allows it (2-TC sharding on v7x), padded batch."""
    b8 = ((b + 7) // 8) * 8
    n_blocks = max(1, pl.cdiv(b8, 1024))
    if b8 >= 16:
        n_blocks = max(n_blocks, 2)
    tb = ((pl.cdiv(b8, n_blocks) + 7) // 8) * 8
    return tb, n_blocks, tb * n_blocks


@functools.partial(jax.jit, static_argnames=("z_dim",))
def vae_forward(x, params, *, z_dim):
    """x: (b, c, h) with c*h == 512. Returns (out (b,c,h) bf16, KL scalar f32)."""
    b, c, h = x.shape
    assert c * h == IN_DIM
    two_z = 2 * z_dim

    tb, n_blocks, b_pad = _batch_tiling(b)
    x_flat = x.reshape(b, IN_DIM).astype(jnp.bfloat16)
    if b_pad > b:
        x_flat = jnp.pad(x_flat, ((0, b_pad - b), (0, 0)))

    # Row-duplicated decoder-1 weight: (2*z_dim, 512) so K=128 on the MXU.
    w_dec1_dup = jnp.concatenate([params["w_dec1"], params["w_dec1"]], axis=0)

    const = lambda i: (0, 0)   # resident blocks (weights / biases)

    weight_bytes = sum(int(np.prod(p.shape)) * p.dtype.itemsize
                       for p in params.values()) + w_dec1_dup.size * 2
    cost = pl.CostEstimate(
        flops=2 * b_pad * (IN_DIM * two_z + two_z * IN_DIM + IN_DIM * IN_DIM),
        transcendentals=b_pad * two_z,
        bytes_accessed=(b_pad * IN_DIM * 2      # x, bf16
                        + b_pad * IN_DIM * 2    # out, bf16
                        + weight_bytes
                        + n_blocks * 128 * 4),  # KL partials
    )

    out_flat, kl_parts = pl.pallas_call(
        functools.partial(_vae_kernel, z_dim=z_dim, batch=b, tb=tb),
        out_shape=(
            jax.ShapeDtypeStruct((b_pad, IN_DIM), jnp.bfloat16),
            jax.ShapeDtypeStruct((n_blocks, 128), jnp.float32),
        ),
        grid=(n_blocks,),
        in_specs=[
            pl.BlockSpec((tb, IN_DIM), lambda i: (i, 0)),      # x (pipelined)
            pl.BlockSpec((IN_DIM, two_z), const),              # w_enc (resident)
            pl.BlockSpec((1, two_z), const),                   # b_enc
            pl.BlockSpec((two_z, IN_DIM), const),              # w_dec1 (duplicated)
            pl.BlockSpec((1, IN_DIM), const),                  # b_dec1
            pl.BlockSpec((IN_DIM, IN_DIM), const),             # w_dec2
            pl.BlockSpec((1, IN_DIM), const),                  # b_dec2
        ],
        out_specs=(
            pl.BlockSpec((tb, IN_DIM), lambda i: (i, 0)),      # out (pipelined)
            pl.BlockSpec((1, 128), lambda i: (i, 0)),          # KL partials (lane-dense)
        ),
        compiler_params=pltpu.CompilerParams(
            dimension_semantics=("parallel",)),
        cost_estimate=cost,
    )(
        x_flat,
        params["w_enc"], params["b_enc"],
        w_dec1_dup, params["b_dec1"],
        params["w_dec2"], params["b_dec2"],
    )

    kl = jnp.sum(kl_parts[:, 0]) / (b * z_dim)
    return out_flat[:b].reshape(b, c, h), kl


def init_params(key, z_dim):
    """Deterministic synthetic weights, stored transposed (in, out) so the
    kernel uses plain row-major matmuls (PyTorch Linear is x @ W.T + b).
    Weights in bf16 (MXU-native); biases kept in f32."""
    ks = jax.random.split(key, 6)
    s_enc = 1.0 / np.sqrt(float(IN_DIM))
    s_d1 = 1.0 / np.sqrt(float(z_dim))
    s_d2 = 1.0 / np.sqrt(float(IN_DIM))
    # encoder weight (2*z_dim, 512): rows [0:z_dim] -> mu, [z_dim:] -> logvar.
    w_enc = jax.random.uniform(ks[0], (2 * z_dim, IN_DIM), jnp.float32, -s_enc, s_enc)
    b_enc = jax.random.uniform(ks[1], (2 * z_dim,), jnp.float32, -s_enc, s_enc)
    w_d1 = jax.random.uniform(ks[2], (IN_DIM, z_dim), jnp.float32, -s_d1, s_d1)
    b_d1 = jax.random.uniform(ks[3], (IN_DIM,), jnp.float32, -s_d1, s_d1)
    w_d2 = jax.random.uniform(ks[4], (IN_DIM, IN_DIM), jnp.float32, -s_d2, s_d2)
    b_d2 = jax.random.uniform(ks[5], (IN_DIM,), jnp.float32, -s_d2, s_d2)
    return {
        "w_enc": w_enc.T.astype(jnp.bfloat16),               # (512, 2*z_dim)
        "b_enc": b_enc.reshape(1, 2 * z_dim),                 # f32
        "w_dec1": w_d1.T.astype(jnp.bfloat16),                # (z_dim, 512)
        "b_dec1": b_d1.reshape(1, IN_DIM),                    # f32
        "w_dec2": w_d2.T.astype(jnp.bfloat16),                # (512, 512)
        "b_dec2": b_d2.reshape(1, IN_DIM),                    # f32
    }


def vae_forward_ref(x, params, *, z_dim):
    """Pure-JAX reference mirroring the kernel's mixed precision (bf16 matmul
    operands, f32 accumulation), for verification."""
    b, c, h = x.shape
    xf = x.reshape(b, IN_DIM).astype(jnp.bfloat16)
    enc = jnp.dot(xf, params["w_enc"],
                  preferred_element_type=jnp.float32) + params["b_enc"]
    mu, logvar = enc[:, :z_dim], enc[:, z_dim:]
    std = jnp.exp(logvar)
    z = mu + std
    h1 = jnp.maximum(jnp.dot(z.astype(jnp.bfloat16), params["w_dec1"],
                             preferred_element_type=jnp.float32) + params["b_dec1"], 0.0)
    out = jnp.dot(h1.astype(jnp.bfloat16), params["w_dec2"],
                  preferred_element_type=jnp.float32) + params["b_dec2"]
    kl = jnp.mean(0.5 * (mu ** 2 + std ** 2 - 1.0) - logvar)
    return out.reshape(b, c, h), kl


if __name__ == "__main__":
    Z_DIM = 64
    B, C, H = 2, 4, 128            # c * h must equal 512 (Linear(512, ...))

    key = jax.random.PRNGKey(0)
    kx, kp = jax.random.split(key)
    x = jax.random.normal(kx, (B, C, H), dtype=jnp.float32)
    params = init_params(kp, Z_DIM)

    out, kl = vae_forward(x, params, z_dim=Z_DIM)
    jax.block_until_ready((out, kl))

    out_ref, kl_ref = vae_forward_ref(x, params, z_dim=Z_DIM)
    assert out.shape == (B, C, H) and out.dtype == jnp.bfloat16
    np.testing.assert_allclose(np.asarray(out, dtype=np.float32),
                               np.asarray(out_ref, dtype=np.float32),
                               rtol=2e-2, atol=2e-2)
    np.testing.assert_allclose(float(kl), float(kl_ref), rtol=1e-2, atol=1e-2)

    print("KERNEL_OK")
</pallas_src>

<mosaic_0001>
module attributes {stable_mosaic.version = 11 : i64} {
  func.func @_vae_kernel(%arg0: i32, %arg1: memref<8x512xbf16, #tpu.memory_space<vmem>>, %arg2: memref<512x128xbf16, #tpu.memory_space<vmem>>, %arg3: memref<1x128xf32, #tpu.memory_space<vmem>>, %arg4: memref<128x512xbf16, #tpu.memory_space<vmem>>, %arg5: memref<1x512xf32, #tpu.memory_space<vmem>>, %arg6: memref<512x512xbf16, #tpu.memory_space<vmem>>, %arg7: memref<1x512xf32, #tpu.memory_space<vmem>>, %arg8: memref<8x512xbf16, #tpu.memory_space<vmem>>, %arg9: memref<1x128xf32, #tpu.memory_space<vmem>>) attributes {dimension_semantics = [#tpu.dimension_semantics<parallel>], iteration_bounds = array<i64: 1>, scalar_prefetch = 0 : i64, scratch_operands = 0 : i64, tpu.core_type = #tpu.core_type<tc>, window_params = [{transform_indices = @transform_0, window_bounds = array<i64: 8, 512>}, {pipeline_mode = #tpu.pipeline_mode<synchronous>, transform_indices = @transform_1, window_bounds = array<i64: 512, 128>}, {pipeline_mode = #tpu.pipeline_mode<synchronous>, transform_indices = @transform_2, window_bounds = array<i64: 1, 128>}, {pipeline_mode = #tpu.pipeline_mode<synchronous>, transform_indices = @transform_3, window_bounds = array<i64: 128, 512>}, {pipeline_mode = #tpu.pipeline_mode<synchronous>, transform_indices = @transform_4, window_bounds = array<i64: 1, 512>}, {pipeline_mode = #tpu.pipeline_mode<synchronous>, transform_indices = @transform_5, window_bounds = array<i64: 512, 512>}, {pipeline_mode = #tpu.pipeline_mode<synchronous>, transform_indices = @transform_6, window_bounds = array<i64: 1, 512>}, {transform_indices = @transform_7, window_bounds = array<i64: 8, 512>}, {transform_indices = @transform_8, window_bounds = array<i64: 1, 128>}]} {
    %c0 = arith.constant 0 : index
    %c0_0 = arith.constant 0 : index
    %0 = vector.load %arg1[%c0, %c0_0] : memref<8x512xbf16, #tpu.memory_space<vmem>>, vector<8x512xbf16>
    %c0_1 = arith.constant 0 : index
    %c0_2 = arith.constant 0 : index
    %1 = vector.load %arg2[%c0_1, %c0_2] : memref<512x128xbf16, #tpu.memory_space<vmem>>, vector<512x128xbf16>
    %cst = arith.constant dense<0.000000e+00> : vector<8x128xf32>
    %2 = tpu.matmul %0, %1, %cst {dimension_numbers = #tpu.dot_dimension_numbers<[1], [0], [0], [1], [0, 0, 1, 1], [], []>} : vector<8x512xbf16>, vector<512x128xbf16>, vector<8x128xf32> -> vector<8x128xf32>
    %c0_3 = arith.constant 0 : index
    %c0_4 = arith.constant 0 : index
    %3 = vector.load %arg3[%c0_3, %c0_4] : memref<1x128xf32, #tpu.memory_space<vmem>>, vector<1x128xf32>
    %4 = vector.broadcast %3 : vector<1x128xf32> to vector<8x128xf32>
    %5 = arith.addf %2, %4 : vector<8x128xf32>
    %6 = tpu.iota {dimensions = array<i32: 1>} : vector<8x128xi32>
    %c64_i32 = arith.constant 64 : i32
    %7 = vector.broadcast %c64_i32 : i32 to vector<8x128xi32>
    %8 = arith.cmpi slt, %6, %7 : vector<8x128xi32>
    %9 = math.exp %5 : vector<8x128xf32>
    %10 = arith.select %8, %5, %9 : vector<8x128xi1>, vector<8x128xf32>
    %11 = arith.truncf %10 : vector<8x128xf32> to vector<8x128xbf16>
    %c0_5 = arith.constant 0 : index
    %c0_6 = arith.constant 0 : index
    %12 = vector.load %arg4[%c0_5, %c0_6] : memref<128x512xbf16, #tpu.memory_space<vmem>>, vector<128x512xbf16>
    %cst_7 = arith.constant dense<0.000000e+00> : vector<8x512xf32>
    %13 = tpu.matmul %11, %12, %cst_7 {dimension_numbers = #tpu.dot_dimension_numbers<[1], [0], [0], [1], [0, 0, 1, 1], [], []>} : vector<8x128xbf16>, vector<128x512xbf16>, vector<8x512xf32> -> vector<8x512xf32>
    %c0_8 = arith.constant 0 : index
    %c0_9 = arith.constant 0 : index
    %14 = vector.load %arg5[%c0_8, %c0_9] : memref<1x512xf32, #tpu.memory_space<vmem>>, vector<1x512xf32>
    %15 = vector.broadcast %14 : vector<1x512xf32> to vector<8x512xf32>
    %16 = arith.addf %13, %15 : vector<8x512xf32>
    %cst_10 = arith.constant 0.000000e+00 : f32
    %17 = vector.broadcast %cst_10 : f32 to vector<8x512xf32>
    %18 = arith.maximumf %16, %17 : vector<8x512xf32>
    %19 = arith.truncf %18 : vector<8x512xf32> to vector<8x512xbf16>
    %c0_11 = arith.constant 0 : index
    %c0_12 = arith.constant 0 : index
    %20 = vector.load %arg6[%c0_11, %c0_12] : memref<512x512xbf16, #tpu.memory_space<vmem>>, vector<512x512xbf16>
    %cst_13 = arith.constant dense<0.000000e+00> : vector<8x512xf32>
    %21 = tpu.matmul %19, %20, %cst_13 {dimension_numbers = #tpu.dot_dimension_numbers<[1], [0], [0], [1], [0, 0, 1, 1], [], []>} : vector<8x512xbf16>, vector<512x512xbf16>, vector<8x512xf32> -> vector<8x512xf32>
    %c0_14 = arith.constant 0 : index
    %c0_15 = arith.constant 0 : index
    %22 = vector.load %arg7[%c0_14, %c0_15] : memref<1x512xf32, #tpu.memory_space<vmem>>, vector<1x512xf32>
    %23 = vector.broadcast %22 : vector<1x512xf32> to vector<8x512xf32>
    %24 = arith.addf %21, %23 : vector<8x512xf32>
    %25 = arith.truncf %24 : vector<8x512xf32> to vector<8x512xbf16>
    %c0_16 = arith.constant 0 : index
    %c0_17 = arith.constant 0 : index
    %26 = vector.load %arg8[%c0_16, %c0_17] : memref<8x512xbf16, #tpu.memory_space<vmem>>, vector<8x512xbf16>
    tpu.vector_store %arg8[%c0_16, %c0_17], %25 {strides = array<i32>} : memref<8x512xbf16, #tpu.memory_space<vmem>>, vector<8x512xbf16>,
    %27 = arith.mulf %10, %10 : vector<8x128xf32>
    %cst_18 = arith.constant 5.000000e-01 : f32
    %28 = vector.broadcast %cst_18 : f32 to vector<8x128xf32>
    %29 = arith.mulf %28, %27 : vector<8x128xf32>
    %cst_19 = arith.constant 2.500000e-01 : f32
    %30 = vector.broadcast %cst_19 : f32 to vector<8x128xf32>
    %31 = arith.subf %29, %30 : vector<8x128xf32>
    %cst_20 = arith.constant 0.000000e+00 : f32
    %32 = vector.broadcast %cst_20 : f32 to vector<8x128xf32>
    %33 = arith.select %8, %32, %5 : vector<8x128xi1>, vector<8x128xf32>
    %34 = arith.subf %31, %33 : vector<8x128xf32>
    %35 = tpu.iota {dimensions = array<i32: 0>} : vector<8x1xi32>
    %c8_i32 = arith.constant 8 : i32
    %36 = arith.muli %arg0, %c8_i32 : i32
    %37 = vector.broadcast %36 : i32 to vector<8x1xi32>
    %38 = arith.addi %35, %37 : vector<8x1xi32>
    %c2_i32 = arith.constant 2 : i32
    %39 = vector.broadcast %c2_i32 : i32 to vector<8x1xi32>
    %40 = arith.cmpi slt, %38, %39 : vector<8x1xi32>
    %cst_21 = arith.constant 0.000000e+00 : f32
    %41 = vector.shape_cast %40 : vector<8x1xi1> to vector<8x1xi1>
    %42 = vector.broadcast %41 : vector<8x1xi1> to vector<8x128xi1>
    %43 = vector.broadcast %cst_21 : f32 to vector<8x128xf32>
    %44 = arith.select %42, %34, %43 : vector<8x128xi1>, vector<8x128xf32>
    %45 = vector.shape_cast %44 : vector<8x128xf32> to vector<1x8x128xf32>
    %cst_22 = arith.constant dense<0.000000e+00> : vector<1xf32>
    %46 = vector.multi_reduction <add>, %45, %cst_22 [1, 2] : vector<1x8x128xf32> to vector<1xf32>
    %47 = vector.shape_cast %46 : vector<1xf32> to vector<1x1x1xf32>
    %48 = vector.extract %47[0, 0, 0] : f32 from vector<1x1x1xf32>
    %49 = vector.broadcast %48 : f32 to vector<1x128xf32>
    %c0_23 = arith.constant 0 : index
    %c0_24 = arith.constant 0 : index
    %50 = vector.load %arg9[%c0_23, %c0_24] : memref<1x128xf32, #tpu.memory_space<vmem>>, vector<1x128xf32>
    tpu.vector_store %arg9[%c0_23, %c0_24], %49 {strides = array<i32>} : memref<1x128xf32, #tpu.memory_space<vmem>>, vector<1x128xf32>,
    return
  }
  func.func @transform_0(%arg0: i32) -> (i32, i32) {
    %c0_i32 = arith.constant 0 : i32
    %c0_i32_0 = arith.constant 0 : i32
    return %arg0, %c0_i32 : i32, i32
  }
  func.func @transform_1(%arg0: i32) -> (i32, i32) {
    %c0_i32 = arith.constant 0 : i32
    %c0_i32_0 = arith.constant 0 : i32
    %c0_i32_1 = arith.constant 0 : i32
    return %c0_i32, %c0_i32_0 : i32, i32
  }
  func.func @transform_2(%arg0: i32) -> (i32, i32) {
    %c0_i32 = arith.constant 0 : i32
    %c0_i32_0 = arith.constant 0 : i32
    %c0_i32_1 = arith.constant 0 : i32
    return %c0_i32, %c0_i32_0 : i32, i32
  }
  func.func @transform_3(%arg0: i32) -> (i32, i32) {
    %c0_i32 = arith.constant 0 : i32
    %c0_i32_0 = arith.constant 0 : i32
    %c0_i32_1 = arith.constant 0 : i32
    return %c0_i32, %c0_i32_0 : i32, i32
  }
  func.func @transform_4(%arg0: i32) -> (i32, i32) {
    %c0_i32 = arith.constant 0 : i32
    %c0_i32_0 = arith.constant 0 : i32
    %c0_i32_1 = arith.constant 0 : i32
    return %c0_i32, %c0_i32_0 : i32, i32
  }
  func.func @transform_5(%arg0: i32) -> (i32, i32) {
    %c0_i32 = arith.constant 0 : i32
    %c0_i32_0 = arith.constant 0 : i32
    %c0_i32_1 = arith.constant 0 : i32
    return %c0_i32, %c0_i32_0 : i32, i32
  }
  func.func @transform_6(%arg0: i32) -> (i32, i32) {
    %c0_i32 = arith.constant 0 : i32
    %c0_i32_0 = arith.constant 0 : i32
    %c0_i32_1 = arith.constant 0 : i32
    return %c0_i32, %c0_i32_0 : i32, i32
  }
  func.func @transform_7(%arg0: i32) -> (i32, i32) {
    %c0_i32 = arith.constant 0 : i32
    %c0_i32_0 = arith.constant 0 : i32
    return %arg0, %c0_i32 : i32, i32
  }
  func.func @transform_8(%arg0: i32) -> (i32, i32) {
    %c0_i32 = arith.constant 0 : i32
    %c0_i32_0 = arith.constant 0 : i32
    return %arg0, %c0_i32 : i32, i32
  }
}

</mosaic_0001>

<llo_original>
// kernel: vae_forward.1
$region0: #{vae_forward.1}
  #allocation0 [shape = 'u32[]', space=smem, size = 0x4, offset = 0x4, fixed_abs, tag = 'smem constant byte address 0x4 - core index']
  #allocation1 [shape = 'u32[144,128]{1,0:T(1,128)}', space=vmem, size = 0x12000, scoped, tag = 'internal scratch']
  %s0 = inlined_call_operand.vmem [shape: bf16[8,512], index: 0, kind: input, shape index: {}]
  %s1 = inlined_call_operand.vmem [shape: bf16[512,128], index: 1, kind: input, shape index: {}]
  %s2 = inlined_call_operand.vmem [shape: f32[1,128], index: 2, kind: input, shape index: {}]
  %s3 = inlined_call_operand.vmem [shape: bf16[128,512], index: 3, kind: input, shape index: {}]
  %s4 = inlined_call_operand.vmem [shape: f32[1,512], index: 4, kind: input, shape index: {}]
  %s5 = inlined_call_operand.hbm [shape: bf16[512,512], index: 5, kind: input, shape index: {}]
  %s6 = inlined_call_operand.vmem [shape: f32[1,512], index: 6, kind: input, shape index: {}]
  %s7 = inlined_call_operand.vmem [shape: bf16[8,512], index: 7, kind: output, shape index: {0}]
  %s8 = inlined_call_operand.vmem [shape: f32[1,128], index: 8, kind: output, shape index: {1}]
  %9 = xla_tuple %s7, %s8
  %s10 = sld [smem:[#allocation0]]
  $region50: #{vae_forward.1} parent=0
    _
  %s12 = ssub.s32 1, %s10
  %s13 = scalar_select 0, %s12, %s10
  $region1: #{vae_forward.1} parent=0
    #allocation2 [shape = 'u8[524288]{0}', space=vmem, size = 0x80000, scoped, tag = 'input window, operand 5, single buffered']
    #allocation3 [shape = 's32[1]{0}', space=sflag, size = 0x4, scoped, tag = 'scoped memory for vae_forward.1']
    %14 = vsyncpa [#allocation3], 0
    // Predicated region
    $region2: #{vae_forward.1} parent=1 // pred_check
      _
    $region3: #{vae_forward.1} parent=1 // pred_check_branch
      %16 = sbr.rel (0) target = $region5
    $region4: #{vae_forward.1} parent=1 // pred_region
      _
    $region5: #{vae_forward.1} parent=1 // pred_fallthru
      _
    // Predicated region
    $region6: #{vae_forward.1} parent=1 // pred_check
      _
    $region7: #{vae_forward.1} parent=1 // pred_check_branch
      %18 = sbr.rel (0) target = $region9
    $region8: #{vae_forward.1} parent=1 // pred_region
      _
    $region9: #{vae_forward.1} parent=1 // pred_fallthru
      _
    // Predicated region
    $region10: #{vae_forward.1} parent=1 // pred_check
      _
    $region11: #{vae_forward.1} parent=1 // pred_check_branch
      %20 = sbr.rel (0) target = $region13
    $region12: #{vae_forward.1} parent=1 // pred_region
      _
    $region13: #{vae_forward.1} parent=1 // pred_fallthru
      _
    // Predicated region
    $region14: #{vae_forward.1} parent=1 // pred_check
      _
    $region15: #{vae_forward.1} parent=1 // pred_check_branch
      %22 = sbr.rel (0) target = $region17
    $region16: #{vae_forward.1} parent=1 // pred_region
      _
    $region17: #{vae_forward.1} parent=1 // pred_fallthru
      _
    // Predicated region
    $region18: #{vae_forward.1} parent=1 // pred_check
      _
    $region19: #{vae_forward.1} parent=1 // pred_check_branch
      %24 = sbr.rel (0) target = $region21
    $region20: #{vae_forward.1} parent=1 // pred_region
      _
    $region21: #{vae_forward.1} parent=1 // pred_fallthru
      _
    // Predicated region
    $region22: #{vae_forward.1} parent=1 // pred_check
      _
    $region23: #{vae_forward.1} parent=1 // pred_check_branch
      %26 = sbr.rel (0) target = $region25
    $region24: #{vae_forward.1} parent=1 // pred_region
      %s28 = ssub.s32 16384, 16384
      %29 = vsyncadd [#allocation3], %s28
      %s30 = sshll.u32 [#allocation2], 4
      %s31 = int_to_ptr.vmem [resolvable:$true] %s30
      %36 = dma.hbm_to_vmem [thread:$0]  %s5, 16384, %s31, [#allocation3], 256, 256, 16
    $region25: #{vae_forward.1} parent=1 // pred_fallthru
      _
    // Predicated region
    $region26: #{vae_forward.1} parent=1 // pred_check
      _
    $region27: #{vae_forward.1} parent=1 // pred_check_branch
      %38 = sbr.rel (0) target = $region29
    $region28: #{vae_forward.1} parent=1 // pred_region
      _
    $region29: #{vae_forward.1} parent=1 // pred_fallthru
      _
    // Predicated region
    $region30: #{vae_forward.1} parent=1 // pred_check
      _
    $region31: #{vae_forward.1} parent=1 // pred_check_branch
      %40 = sbr.rel (0) target = $region33
    $region32: #{vae_forward.1} parent=1 // pred_region
      %41 = dma.done [#allocation3], 16384
    $region33: #{vae_forward.1} parent=1 // pred_fallthru
      _
    %v43 = vld [vmem:[%s0] sm:$0xff]
    %v44 = vld [vmem:[%s0 + $0x8] sm:$0xff]
    %v45 = vld [vmem:[%s1] sm:$0xf]
    %v46 = vld [vmem:[%s1 + $0x4] sm:$0xf]
    %v47 = vld [vmem:[%s1 + $0x8] sm:$0xf]
    %v48 = vld [vmem:[%s1 + $0xc] sm:$0xf]
    %v49 = vld [vmem:[%s1 + $0x10] sm:$0xf]
    %v50 = vld [vmem:[%s1 + $0x14] sm:$0xf]
    %v51 = vld [vmem:[%s1 + $0x18] sm:$0xf]
    %v52 = vld [vmem:[%s1 + $0x1c] sm:$0xf]
    %v53 = vld [vmem:[%s1 + $0x20] sm:$0xf]
    %v54 = vld [vmem:[%s1 + $0x24] sm:$0xf]
    %v55 = vld [vmem:[%s1 + $0x28] sm:$0xf]
    %v56 = vld [vmem:[%s1 + $0x2c] sm:$0xf]
    %v57 = vld [vmem:[%s1 + $0x30] sm:$0xf]
    %v58 = vld [vmem:[%s1 + $0x34] sm:$0xf]
    %v59 = vld [vmem:[%s1 + $0x38] sm:$0xf]
    %v60 = vld [vmem:[%s1 + $0x3c] sm:$0xf]
    %v61 = vld [vmem:[%s1 + $0x40] sm:$0xf]
    %v62 = vld [vmem:[%s1 + $0x44] sm:$0xf]
    %v63 = vld [vmem:[%s1 + $0x48] sm:$0xf]
    %v64 = vld [vmem:[%s1 + $0x4c] sm:$0xf]
    %v65 = vld [vmem:[%s1 + $0x50] sm:$0xf]
    %v66 = vld [vmem:[%s1 + $0x54] sm:$0xf]
    %v67 = vld [vmem:[%s1 + $0x58] sm:$0xf]
    %v68 = vld [vmem:[%s1 + $0x5c] sm:$0xf]
    %v69 = vld [vmem:[%s1 + $0x60] sm:$0xf]
    %v70 = vld [vmem:[%s1 + $0x64] sm:$0xf]
    %v71 = vld [vmem:[%s1 + $0x68] sm:$0xf]
    %v72 = vld [vmem:[%s1 + $0x6c] sm:$0xf]
    %v73 = vld [vmem:[%s1 + $0x70] sm:$0xf]
    %v74 = vld [vmem:[%s1 + $0x74] sm:$0xf]
    %v75 = vld [vmem:[%s1 + $0x78] sm:$0xf]
    %v76 = vld [vmem:[%s1 + $0x7c] sm:$0xf]
    %v77 = vld [vmem:[%s1 + $0x80] sm:$0xf]
    %v78 = vld [vmem:[%s1 + $0x84] sm:$0xf]
    %v79 = vld [vmem:[%s1 + $0x88] sm:$0xf]
    %v80 = vld [vmem:[%s1 + $0x8c] sm:$0xf]
    %v81 = vld [vmem:[%s1 + $0x90] sm:$0xf]
    %v82 = vld [vmem:[%s1 + $0x94] sm:$0xf]
    %v83 = vld [vmem:[%s1 + $0x98] sm:$0xf]
    %v84 = vld [vmem:[%s1 + $0x9c] sm:$0xf]
    %v85 = vld [vmem:[%s1 + $0xa0] sm:$0xf]
    %v86 = vld [vmem:[%s1 + $0xa4] sm:$0xf]
    %v87 = vld [vmem:[%s1 + $0xa8] sm:$0xf]
    %v88 = vld [vmem:[%s1 + $0xac] sm:$0xf]
    %v89 = vld [vmem:[%s1 + $0xb0] sm:$0xf]
    %v90 = vld [vmem:[%s1 + $0xb4] sm:$0xf]
    %v91 = vld [vmem:[%s1 + $0xb8] sm:$0xf]
    %v92 = vld [vmem:[%s1 + $0xbc] sm:$0xf]
    %v93 = vld [vmem:[%s1 + $0xc0] sm:$0xf]
    %v94 = vld [vmem:[%s1 + $0xc4] sm:$0xf]
    %v95 = vld [vmem:[%s1 + $0xc8] sm:$0xf]
    %v96 = vld [vmem:[%s1 + $0xcc] sm:$0xf]
    %v97 = vld [vmem:[%s1 + $0xd0] sm:$0xf]
    %v98 = vld [vmem:[%s1 + $0xd4] sm:$0xf]
    %v99 = vld [vmem:[%s1 + $0xd8] sm:$0xf]
    %v100 = vld [vmem:[%s1 + $0xdc] sm:$0xf]
    %v101 = vld [vmem:[%s1 + $0xe0] sm:$0xf]
    %v102 = vld [vmem:[%s1 + $0xe4] sm:$0xf]
    %v103 = vld [vmem:[%s1 + $0xe8] sm:$0xf]
    %v104 = vld [vmem:[%s1 + $0xec] sm:$0xf]
    %v105 = vld [vmem:[%s1 + $0xf0] sm:$0xf]
    %v106 = vld [vmem:[%s1 + $0xf4] sm:$0xf]
    %v107 = vld [vmem:[%s1 + $0xf8] sm:$0xf]
    %v108 = vld [vmem:[%s1 + $0xfc] sm:$0xf]
    %v109 = vld [vmem:[%s2] sm:$0x1]
    %v111 = vlaneseq
    %v112 = vshrl.u32 %v111, 7
    %v113 = vsub.s32 0, %v112
    %v114 = vrot.slane %v109, %v113
    %v118 = vunpack.c.l.b16 %v43
    %v119 = vunpack.c.h.b16 %v43
    %v120 = vunpack.c.l.b16 %v44
    %v121 = vunpack.c.h.b16 %v44
    %v122 = vpack.c.b16 %v118, %v118
    %v123 = vpack.c.b16 %v119, %v119
    %v124 = vpack.c.b16 %v120, %v120
    %v125 = vpack.c.b16 %v121, %v121
    %v194 = vunpack.c.l.b16 %v45
    %v195 = vunpack.c.l.b16 %v46
    %v196 = vunpack.c.l.b16 %v47
    %v197 = vunpack.c.l.b16 %v48
    %v198 = vunpack.c.l.b16 %v49
    %v199 = vunpack.c.l.b16 %v50
    %v200 = vunpack.c.l.b16 %v51
    %v201 = vunpack.c.l.b16 %v52
    %v202 = vunpack.c.l.b16 %v53
    %v203 = vunpack.c.l.b16 %v54
    %v204 = vunpack.c.l.b16 %v55
    %v205 = vunpack.c.l.b16 %v56
    %v206 = vunpack.c.l.b16 %v57
    %v207 = vunpack.c.l.b16 %v58
    %v208 = vunpack.c.l.b16 %v59
    %v209 = vunpack.c.l.b16 %v60
    %v210 = vunpack.c.l.b16 %v61
    %v211 = vunpack.c.l.b16 %v62
    %v212 = vunpack.c.l.b16 %v63
    %v213 = vunpack.c.l.b16 %v64
    %v214 = vunpack.c.l.b16 %v65
    %v215 = vunpack.c.l.b16 %v66
    %v216 = vunpack.c.l.b16 %v67
    %v217 = vunpack.c.l.b16 %v68
    %v218 = vunpack.c.l.b16 %v69
    %v219 = vunpack.c.l.b16 %v70
    %v220 = vunpack.c.l.b16 %v71
    %v221 = vunpack.c.l.b16 %v72
    %v222 = vunpack.c.l.b16 %v73
    %v223 = vunpack.c.l.b16 %v74
    %v224 = vunpack.c.l.b16 %v75
    %v225 = vunpack.c.l.b16 %v76
    %v226 = vunpack.c.l.b16 %v77
    %v227 = vunpack.c.l.b16 %v78
    %v228 = vunpack.c.l.b16 %v79
    %v229 = vunpack.c.l.b16 %v80
    %v230 = vunpack.c.l.b16 %v81
    %v231 = vunpack.c.l.b16 %v82
    %v232 = vunpack.c.l.b16 %v83
    %v233 = vunpack.c.l.b16 %v84
    %v234 = vunpack.c.l.b16 %v85
    %v235 = vunpack.c.l.b16 %v86
    %v236 = vunpack.c.l.b16 %v87
    %v237 = vunpack.c.l.b16 %v88
    %v238 = vunpack.c.l.b16 %v89
    %v239 = vunpack.c.l.b16 %v90
    %v240 = vunpack.c.l.b16 %v91
    %v241 = vunpack.c.l.b16 %v92
    %v242 = vunpack.c.l.b16 %v93
    %v243 = vunpack.c.l.b16 %v94
    %v244 = vunpack.c.l.b16 %v95
    %v245 = vunpack.c.l.b16 %v96
    %v246 = vunpack.c.l.b16 %v97
    %v247 = vunpack.c.l.b16 %v98
    %v248 = vunpack.c.l.b16 %v99
    %v249 = vunpack.c.l.b16 %v100
    %v250 = vunpack.c.l.b16 %v101
    %v251 = vunpack.c.l.b16 %v102
    %v252 = vunpack.c.l.b16 %v103
    %v253 = vunpack.c.l.b16 %v104
    %v254 = vunpack.c.l.b16 %v105
    %v255 = vunpack.c.l.b16 %v106
    %v256 = vunpack.c.l.b16 %v107
    %v257 = vunpack.c.l.b16 %v108
    %v258 = vpack.c.b16 %v195, %v194
    %v259 = vpack.c.b16 %v197, %v196
    %v260 = vpack.c.b16 %v199, %v198
    %v261 = vpack.c.b16 %v201, %v200
    %v262 = vpack.c.b16 %v203, %v202
    %v263 = vpack.c.b16 %v205, %v204
    %v264 = vpack.c.b16 %v207, %v206
    %v265 = vpack.c.b16 %v209, %v208
    %v266 = vpack.c.b16 %v211, %v210
    %v267 = vpack.c.b16 %v213, %v212
    %v268 = vpack.c.b16 %v215, %v214
    %v269 = vpack.c.b16 %v217, %v216
    %v270 = vpack.c.b16 %v219, %v218
    %v271 = vpack.c.b16 %v221, %v220
    %v272 = vpack.c.b16 %v223, %v222
    %v273 = vpack.c.b16 %v225, %v224
    %v274 = vpack.c.b16 %v227, %v226
    %v275 = vpack.c.b16 %v229, %v228
    %v276 = vpack.c.b16 %v231, %v230
    %v277 = vpack.c.b16 %v233, %v232
    %v278 = vpack.c.b16 %v235, %v234
    %v279 = vpack.c.b16 %v237, %v236
    %v280 = vpack.c.b16 %v239, %v238
    %v281 = vpack.c.b16 %v241, %v240
    %v282 = vpack.c.b16 %v243, %v242
    %v283 = vpack.c.b16 %v245, %v244
    %v284 = vpack.c.b16 %v247, %v246
    %v285 = vpack.c.b16 %v249, %v248
    %v286 = vpack.c.b16 %v251, %v250
    %v287 = vpack.c.b16 %v253, %v252
    %v288 = vpack.c.b16 %v255, %v254
    %v289 = vpack.c.b16 %v257, %v256
    %322 = vmatprep.subr.bf16.mxu0 0
    %323 = vmatpush1.bf16.msra.mxu0 %v258
    %324 = vmatprep.subr.bf16.mxu0 0
    %325 = vmatpush1.bf16.msra.mxu0 %v259
    %326 = vmatprep.subr.bf16.mxu0 0
    %327 = vmatpush1.bf16.msra.mxu0 %v260
    %328 = vmatprep.subr.bf16.mxu0 0
    %329 = vmatpush1.bf16.msra.mxu0 %v261
    %330 = vmatprep.subr.bf16.mxu0 0
    %331 = vmatpush1.bf16.msra.mxu0 %v262
    %332 = vmatprep.subr.bf16.mxu0 0
    %333 = vmatpush1.bf16.msra.mxu0 %v263
    %334 = vmatprep.subr.bf16.mxu0 0
    %335 = vmatpush1.bf16.msra.mxu0 %v264
    %336 = vmatprep.subr.bf16.mxu0 0
    %337 = vmatpush1.bf16.msra.mxu0 %v265
    %338 = vmatprep.subr.bf16.mxu0 0
    %339 = vmatpush1.bf16.msra.mxu0 %v266
    %340 = vmatprep.subr.bf16.mxu0 0
    %341 = vmatpush1.bf16.msra.mxu0 %v267
    %342 = vmatprep.subr.bf16.mxu0 0
    %343 = vmatpush1.bf16.msra.mxu0 %v268
    %344 = vmatprep.subr.bf16.mxu0 0
    %345 = vmatpush1.bf16.msra.mxu0 %v269
    %346 = vmatprep.subr.bf16.mxu0 0
    %347 = vmatpush1.bf16.msra.mxu0 %v270
    %348 = vmatprep.subr.bf16.mxu0 0
    %349 = vmatpush1.bf16.msra.mxu0 %v271
    %350 = vmatprep.subr.bf16.mxu0 0
    %351 = vmatpush1.bf16.msra.mxu0 %v272
    %352 = vmatprep.subr.bf16.mxu0 0
    %353 = vmatpush1.bf16.msra.mxu0 %v273
    %354 = vmatprep.mubr.bf16.mxu0 %v123
    %355 = vmatmul.mubr.bf16.gmra.mrb[0].mxu0 %v122
    %v356 = vpop.f32.mrb[0].mxu0
    %v357 = vadd.f32 %v114, %v356
    %v358 = vpop.f32.mrb[0].mxu0
    %v359 = vpop.f32.mrb[0].mxu0
    %v360 = vpop.f32.mrb[0].mxu0
    %361 = vdwg.mxu0
    %362 = vmatprep.subr.bf16.mxu0 0
    %363 = vmatpush1.bf16.msra.mxu0 %v274
    %364 = vmatprep.subr.bf16.mxu0 0
    %365 = vmatpush1.bf16.msra.mxu0 %v275
    %366 = vmatprep.subr.bf16.mxu0 0
    %367 = vmatpush1.bf16.msra.mxu0 %v276
    %368 = vmatprep.subr.bf16.mxu0 0
    %369 = vmatpush1.bf16.msra.mxu0 %v277
    %370 = vmatprep.subr.bf16.mxu0 0
    %371 = vmatpush1.bf16.msra.mxu0 %v278
    %372 = vmatprep.subr.bf16.mxu0 0
    %373 = vmatpush1.bf16.msra.mxu0 %v279
    %374 = vmatprep.subr.bf16.mxu0 0
    %375 = vmatpush1.bf16.msra.mxu0 %v280
    %376 = vmatprep.subr.bf16.mxu0 0
    %377 = vmatpush1.bf16.msra.mxu0 %v281
    %378 = vmatprep.subr.bf16.mxu0 0
    %379 = vmatpush1.bf16.msra.mxu0 %v282
    %380 = vmatprep.subr.bf16.mxu0 0
    %381 = vmatpush1.bf16.msra.mxu0 %v283
    %382 = vmatprep.subr.bf16.mxu0 0
    %383 = vmatpush1.bf16.msra.mxu0 %v284
    %384 = vmatprep.subr.bf16.mxu0 0
    %385 = vmatpush1.bf16.msra.mxu0 %v285
    %386 = vmatprep.subr.bf16.mxu0 0
    %387 = vmatpush1.bf16.msra.mxu0 %v286
    %388 = vmatprep.subr.bf16.mxu0 0
    %389 = vmatpush1.bf16.msra.mxu0 %v287
    %390 = vmatprep.subr.bf16.mxu0 0
    %391 = vmatpush1.bf16.msra.mxu0 %v288
    %392 = vmatprep.subr.bf16.mxu0 0
    %393 = vmatpush1.bf16.msra.mxu0 %v289
    %394 = vmatprep.mubr.bf16.mxu0 %v125
    %395 = vmatmul.mubr.bf16.gmra.mrb[0].mxu0 %v124
    %v396 = vpop.f32.mrb[0].mxu0
    %v397 = vadd.f32 %v357, %v396
    %v398 = vpop.f32.mrb[0].mxu0
    %v399 = vpop.f32.mrb[0].mxu0
    %v400 = vpop.f32.mrb[0].mxu0
    %401 = vdwg.mxu0
    %v402 = vlaneseq
    %v403 = vand.u32 %v402, 127
    %vm404 = vcmp.lt.s32.totalorder %v403, 64
    %v405 = vmul.f32 %v397, 1.442695
    %v406 = vpow.pop %v405
    %v407 = vsel %vm404, %v397, %v406
    %v408 = vpack.c.bf16 %v407, %v407
    %v409 = vld [vmem:[%s3] sm:$0xff]
    %v410 = vld [vmem:[%s3 + $0x8] sm:$0xff]
    %v411 = vld [vmem:[%s3 + $0x10] sm:$0xff]
    %v412 = vld [vmem:[%s3 + $0x18] sm:$0xff]
    %v413 = vld [vmem:[%s3 + $0x20] sm:$0xff]
    %v414 = vld [vmem:[%s3 + $0x28] sm:$0xff]
    %v415 = vld [vmem:[%s3 + $0x30] sm:$0xff]
    %v416 = vld [vmem:[%s3 + $0x38] sm:$0xff]
    %v417 = vld [vmem:[%s3 + $0x40] sm:$0xff]
    %v418 = vld [vmem:[%s3 + $0x48] sm:$0xff]
    %v419 = vld [vmem:[%s3 + $0x50] sm:$0xff]
    %v420 = vld [vmem:[%s3 + $0x58] sm:$0xff]
    %v421 = vld [vmem:[%s3 + $0x60] sm:$0xff]
    %v422 = vld [vmem:[%s3 + $0x68] sm:$0xff]
    %v423 = vld [vmem:[%s3 + $0x70] sm:$0xff]
    %v424 = vld [vmem:[%s3 + $0x78] sm:$0xff]
    %v425 = vld [vmem:[%s3 + $0x80] sm:$0xff]
    %v426 = vld [vmem:[%s3 + $0x88] sm:$0xff]
    %v427 = vld [vmem:[%s3 + $0x90] sm:$0xff]
    %v428 = vld [vmem:[%s3 + $0x98] sm:$0xff]
    %v429 = vld [vmem:[%s3 + $0xa0] sm:$0xff]
    %v430 = vld [vmem:[%s3 + $0xa8] sm:$0xff]
    %v431 = vld [vmem:[%s3 + $0xb0] sm:$0xff]
    %v432 = vld [vmem:[%s3 + $0xb8] sm:$0xff]
    %v433 = vld [vmem:[%s3 + $0xc0] sm:$0xff]
    %v434 = vld [vmem:[%s3 + $0xc8] sm:$0xff]
    %v435 = vld [vmem:[%s3 + $0xd0] sm:$0xff]
    %v436 = vld [vmem:[%s3 + $0xd8] sm:$0xff]
    %v437 = vld [vmem:[%s3 + $0xe0] sm:$0xff]
    %v438 = vld [vmem:[%s3 + $0xe8] sm:$0xff]
    %v439 = vld [vmem:[%s3 + $0xf0] sm:$0xff]
    %v440 = vld [vmem:[%s3 + $0xf8] sm:$0xff]
    %v441 = vld [vmem:[%s4] sm:$0xf]
    %v443 = vlaneseq
    %v444 = vshrl.u32 %v443, 7
    %v445 = vsub.s32 0, %v444
    %v446 = vrot.slane %v441, %v445
    %v447 = vlaneseq
    %v448 = vshrl.u32 %v447, 7
    %v449 = vsub.s32 1, %v448
    %v450 = vrot.slane %v441, %v449
    %v451 = vlaneseq
    %v452 = vshrl.u32 %v451, 7
    %v453 = vsub.s32 2, %v452
    %v454 = vrot.slane %v441, %v453
    %v455 = vlaneseq
    %v456 = vshrl.u32 %v455, 7
    %v457 = vsub.s32 3, %v456
    %v458 = vrot.slane %v441, %v457
    %v495 = vunpack.c.l.b16 %v409
    %v496 = vunpack.c.h.b16 %v409
    %v497 = vunpack.c.l.b16 %v410
    %v498 = vunpack.c.h.b16 %v410
    %v499 = vunpack.c.l.b16 %v411
    %v500 = vunpack.c.h.b16 %v411
    %v501 = vunpack.c.l.b16 %v412
    %v502 = vunpack.c.h.b16 %v412
    %v503 = vunpack.c.l.b16 %v413
    %v504 = vunpack.c.h.b16 %v413
    %v505 = vunpack.c.l.b16 %v414
    %v506 = vunpack.c.h.b16 %v414
    %v507 = vunpack.c.l.b16 %v415
    %v508 = vunpack.c.h.b16 %v415
    %v509 = vunpack.c.l.b16 %v416
    %v510 = vunpack.c.h.b16 %v416
    %v511 = vunpack.c.l.b16 %v417
    %v512 = vunpack.c.h.b16 %v417
    %v513 = vunpack.c.l.b16 %v418
    %v514 = vunpack.c.h.b16 %v418
    %v515 = vunpack.c.l.b16 %v419
    %v516 = vunpack.c.h.b16 %v419
    %v517 = vunpack.c.l.b16 %v420
    %v518 = vunpack.c.h.b16 %v420
    %v519 = vunpack.c.l.b16 %v421
    %v520 = vunpack.c.h.b16 %v421
    %v521 = vunpack.c.l.b16 %v422
    %v522 = vunpack.c.h.b16 %v422
    %v523 = vunpack.c.l.b16 %v423
    %v524 = vunpack.c.h.b16 %v423
    %v525 = vunpack.c.l.b16 %v424
    %v526 = vunpack.c.h.b16 %v424
    %v527 = vunpack.c.l.b16 %v425
    %v528 = vunpack.c.h.b16 %v425
    %v529 = vunpack.c.l.b16 %v426
    %v530 = vunpack.c.h.b16 %v426
    %v531 = vunpack.c.l.b16 %v427
    %v532 = vunpack.c.h.b16 %v427
    %v533 = vunpack.c.l.b16 %v428
    %v534 = vunpack.c.h.b16 %v428
    %v535 = vunpack.c.l.b16 %v429
    %v536 = vunpack.c.h.b16 %v429
    %v537 = vunpack.c.l.b16 %v430
    %v538 = vunpack.c.h.b16 %v430
    %v539 = vunpack.c.l.b16 %v431
    %v540 = vunpack.c.h.b16 %v431
    %v541 = vunpack.c.l.b16 %v432
    %v542 = vunpack.c.h.b16 %v432
    %v543 = vunpack.c.l.b16 %v433
    %v544 = vunpack.c.h.b16 %v433
    %v545 = vunpack.c.l.b16 %v434
    %v546 = vunpack.c.h.b16 %v434
    %v547 = vunpack.c.l.b16 %v435
    %v548 = vunpack.c.h.b16 %v435
    %v549 = vunpack.c.l.b16 %v436
    %v550 = vunpack.c.h.b16 %v436
    %v551 = vunpack.c.l.b16 %v437
    %v552 = vunpack.c.h.b16 %v437
    %v553 = vunpack.c.l.b16 %v438
    %v554 = vunpack.c.h.b16 %v438
    %v555 = vunpack.c.l.b16 %v439
    %v556 = vunpack.c.h.b16 %v439
    %v557 = vunpack.c.l.b16 %v440
    %v558 = vunpack.c.h.b16 %v440
    %v559 = vpack.c.b16 %v499, %v495
    %v560 = vpack.c.b16 %v500, %v496
    %v561 = vpack.c.b16 %v501, %v497
    %v562 = vpack.c.b16 %v502, %v498
    %v563 = vpack.c.b16 %v507, %v503
    %v564 = vpack.c.b16 %v508, %v504
    %v565 = vpack.c.b16 %v509, %v505
    %v566 = vpack.c.b16 %v510, %v506
    %v567 = vpack.c.b16 %v515, %v511
    %v568 = vpack.c.b16 %v516, %v512
    %v569 = vpack.c.b16 %v517, %v513
    %v570 = vpack.c.b16 %v518, %v514
    %v571 = vpack.c.b16 %v523, %v519
    %v572 = vpack.c.b16 %v524, %v520
    %v573 = vpack.c.b16 %v525, %v521
    %v574 = vpack.c.b16 %v526, %v522
    %v575 = vpack.c.b16 %v531, %v527
    %v576 = vpack.c.b16 %v532, %v528
    %v577 = vpack.c.b16 %v533, %v529
    %v578 = vpack.c.b16 %v534, %v530
    %v579 = vpack.c.b16 %v539, %v535
    %v580 = vpack.c.b16 %v540, %v536
    %v581 = vpack.c.b16 %v541, %v537
    %v582 = vpack.c.b16 %v542, %v538
    %v583 = vpack.c.b16 %v547, %v543
    %v584 = vpack.c.b16 %v548, %v544
    %v585 = vpack.c.b16 %v549, %v545
    %v586 = vpack.c.b16 %v550, %v546
    %v587 = vpack.c.b16 %v555, %v551
    %v588 = vpack.c.b16 %v556, %v552
    %v589 = vpack.c.b16 %v557, %v553
    %v590 = vpack.c.b16 %v558, %v554
    %623 = vmatprep.subr.bf16.mxu0 %v560
    %624 = vmatpush1.bf16.msra.mxu0 %v559
    %625 = vmatprep.subr.bf16.mxu0 %v564
    %626 = vmatpush1.bf16.msra.mxu0 %v563
    %627 = vmatprep.subr.bf16.mxu0 %v568
    %628 = vmatpush1.bf16.msra.mxu0 %v567
    %629 = vmatprep.subr.bf16.mxu0 %v572
    %630 = vmatpush1.bf16.msra.mxu0 %v571
    %631 = vmatprep.subr.bf16.mxu0 %v576
    %632 = vmatpush1.bf16.msra.mxu0 %v575
    %633 = vmatprep.subr.bf16.mxu0 %v580
    %634 = vmatpush1.bf16.msra.mxu0 %v579
    %635 = vmatprep.subr.bf16.mxu0 %v584
    %636 = vmatpush1.bf16.msra.mxu0 %v583
    %637 = vmatprep.subr.bf16.mxu0 %v588
    %638 = vmatpush1.bf16.msra.mxu0 %v587
    %639 = vmatprep.subr.bf16.mxu0 0
    %640 = vmatpush1.bf16.msra.mxu0 0
    %641 = vmatprep.subr.bf16.mxu0 0
    %642 = vmatpush1.bf16.msra.mxu0 0
    %643 = vmatprep.subr.bf16.mxu0 0
    %644 = vmatpush1.bf16.msra.mxu0 0
    %645 = vmatprep.subr.bf16.mxu0 0
    %646 = vmatpush1.bf16.msra.mxu0 0
    %647 = vmatprep.subr.bf16.mxu0 0
    %648 = vmatpush1.bf16.msra.mxu0 0
    %649 = vmatprep.subr.bf16.mxu0 0
    %650 = vmatpush1.bf16.msra.mxu0 0
    %651 = vmatprep.subr.bf16.mxu0 0
    %652 = vmatpush1.bf16.msra.mxu0 0
    %653 = vmatprep.subr.bf16.mxu0 0
    %654 = vmatpush1.bf16.msra.mxu0 0
    %655 = vmatprep.mubr.bf16.mxu0 0
    %656 = vmatmul.mubr.bf16.gmra.mrb[0].mxu0 %v408
    %v657 = vpop.f32.mrb[0].mxu0
    %v658 = vadd.f32 %v446, %v657
    %v659 = vpop.f32.mrb[0].mxu0
    %v660 = vadd.f32 %v450, %v659
    %v661 = vpop.f32.mrb[0].mxu0
    %v662 = vpop.f32.mrb[0].mxu0
    %663 = vdwg.mxu0
    %664 = vmatprep.subr.bf16.mxu0 %v562
    %665 = vmatpush1.bf16.msra.mxu0 %v561
    %666 = vmatprep.subr.bf16.mxu0 %v566
    %667 = vmatpush1.bf16.msra.mxu0 %v565
    %668 = vmatprep.subr.bf16.mxu0 %v570
    %669 = vmatpush1.bf16.msra.mxu0 %v569
    %670 = vmatprep.subr.bf16.mxu0 %v574
    %671 = vmatpush1.bf16.msra.mxu0 %v573
    %672 = vmatprep.subr.bf16.mxu0 %v578
    %673 = vmatpush1.bf16.msra.mxu0 %v577
    %674 = vmatprep.subr.bf16.mxu0 %v582
    %675 = vmatpush1.bf16.msra.mxu0 %v581
    %676 = vmatprep.subr.bf16.mxu0 %v586
    %677 = vmatpush1.bf16.msra.mxu0 %v585
    %678 = vmatprep.subr.bf16.mxu0 %v590
    %679 = vmatpush1.bf16.msra.mxu0 %v589
    %680 = vmatprep.subr.bf16.mxu0 0
    %681 = vmatpush1.bf16.msra.mxu0 0
    %682 = vmatprep.subr.bf16.mxu0 0
    %683 = vmatpush1.bf16.msra.mxu0 0
    %684 = vmatprep.subr.bf16.mxu0 0
    %685 = vmatpush1.bf16.msra.mxu0 0
    %686 = vmatprep.subr.bf16.mxu0 0
    %687 = vmatpush1.bf16.msra.mxu0 0
    %688 = vmatprep.subr.bf16.mxu0 0
    %689 = vmatpush1.bf16.msra.mxu0 0
    %690 = vmatprep.subr.bf16.mxu0 0
    %691 = vmatpush1.bf16.msra.mxu0 0
    %692 = vmatprep.subr.bf16.mxu0 0
    %693 = vmatpush1.bf16.msra.mxu0 0
    %694 = vmatprep.subr.bf16.mxu0 0
    %695 = vmatpush1.bf16.msra.mxu0 0
    %696 = vmatprep.mubr.bf16.mxu0 0
    %697 = vmatmul.mubr.bf16.gmra.mrb[0].mxu0 %v408
    %v698 = vpop.f32.mrb[0].mxu0
    %v699 = vadd.f32 %v454, %v698
    %v700 = vpop.f32.mrb[0].mxu0
    %v701 = vadd.f32 %v458, %v700
    %v702 = vpop.f32.mrb[0].mxu0
    %v703 = vpop.f32.mrb[0].mxu0
    %704 = vdwg.mxu0
    %v705 = vmax.f32 %v658, 0.0
    %v706 = vmax.f32 %v660, 0.0
    %v707 = vmax.f32 %v699, 0.0
    %v708 = vmax.f32 %v701, 0.0
    %v709 = vpack.c.bf16 %v705, %v705
    %v710 = vpack.c.bf16 %v706, %v706
    %v711 = vpack.c.bf16 %v707, %v707
    %v712 = vpack.c.bf16 %v708, %v708
    %v713 = vld [vmem:[#allocation2] sm:$0xff]
    %v714 = vld [vmem:[#allocation2 + $0x8] sm:$0xff]
    %v715 = vld [vmem:[#allocation2 + $0x10] sm:$0xff]
    %v716 = vld [vmem:[#allocation2 + $0x18] sm:$0xff]
    %v717 = vld [vmem:[#allocation2 + $0x20] sm:$0xff]
    %v718 = vld [vmem:[#allocation2 + $0x28] sm:$0xff]
    %v719 = vld [vmem:[#allocation2 + $0x30] sm:$0xff]
    %v720 = vld [vmem:[#allocation2 + $0x38] sm:$0xff]
    %v721 = vld [vmem:[#allocation2 + $0x40] sm:$0xff]
    %v722 = vld [vmem:[#allocation2 + $0x48] sm:$0xff]
    %v723 = vld [vmem:[#allocation2 + $0x50] sm:$0xff]
    %v724 = vld [vmem:[#allocation2 + $0x58] sm:$0xff]
    %v725 = vld [vmem:[#allocation2 + $0x60] sm:$0xff]
    %v726 = vld [vmem:[#allocation2 + $0x68] sm:$0xff]
    %v727 = vld [vmem:[#allocation2 + $0x70] sm:$0xff]
    %v728 = vld [vmem:[#allocation2 + $0x78] sm:$0xff]
    %v729 = vld [vmem:[#allocation2 + $0x80] sm:$0xff]
    %v730 = vld [vmem:[#allocation2 + $0x88] sm:$0xff]
    %v731 = vld [vmem:[#allocation2 + $0x90] sm:$0xff]
    %v732 = vld [vmem:[#allocation2 + $0x98] sm:$0xff]
    %v733 = vld [vmem:[#allocation2 + $0xa0] sm:$0xff]
    %v734 = vld [vmem:[#allocation2 + $0xa8] sm:$0xff]
    %v735 = vld [vmem:[#allocation2 + $0xb0] sm:$0xff]
    %v736 = vld [vmem:[#allocation2 + $0xb8] sm:$0xff]
    %v737 = vld [vmem:[#allocation2 + $0xc0] sm:$0xff]
    %v738 = vld [vmem:[#allocation2 + $0xc8] sm:$0xff]
    %v739 = vld [vmem:[#allocation2 + $0xd0] sm:$0xff]
    %v740 = vld [vmem:[#allocation2 + $0xd8] sm:$0xff]
    %v741 = vld [vmem:[#allocation2 + $0xe0] sm:$0xff]
    %v742 = vld [vmem:[#allocation2 + $0xe8] sm:$0xff]
    %v743 = vld [vmem:[#allocation2 + $0xf0] sm:$0xff]
    %v744 = vld [vmem:[#allocation2 + $0xf8] sm:$0xff]
    %v745 = vld [vmem:[#allocation2 + $0x100] sm:$0xff]
    %v746 = vld [vmem:[#allocation2 + $0x108] sm:$0xff]
    %v747 = vld [vmem:[#allocation2 + $0x110] sm:$0xff]
    %v748 = vld [vmem:[#allocation2 + $0x118] sm:$0xff]
    %v749 = vld [vmem:[#allocation2 + $0x120] sm:$0xff]
    %v750 = vld [vmem:[#allocation2 + $0x128] sm:$0xff]
    %v751 = vld [vmem:[#allocation2 + $0x130] sm:$0xff]
    %v752 = vld [vmem:[#allocation2 + $0x138] sm:$0xff]
    %v753 = vld [vmem:[#allocation2 + $0x140] sm:$0xff]
    %v754 = vld [vmem:[#allocation2 + $0x148] sm:$0xff]
    %v755 = vld [vmem:[#allocation2 + $0x150] sm:$0xff]
    %v756 = vld [vmem:[#allocation2 + $0x158] sm:$0xff]
    %v757 = vld [vmem:[#allocation2 + $0x160] sm:$0xff]
    %v758 = vld [vmem:[#allocation2 + $0x168] sm:$0xff]
    %v759 = vld [vmem:[#allocation2 + $0x170] sm:$0xff]
    %v760 = vld [vmem:[#allocation2 + $0x178] sm:$0xff]
    %v761 = vld [vmem:[#allocation2 + $0x180] sm:$0xff]
    %v762 = vld [vmem:[#allocation2 + $0x188] sm:$0xff]
    %v763 = vld [vmem:[#allocation2 + $0x190] sm:$0xff]
    %v764 = vld [vmem:[#allocation2 + $0x198] sm:$0xff]
    %v765 = vld [vmem:[#allocation2 + $0x1a0] sm:$0xff]
    %v766 = vld [vmem:[#allocation2 + $0x1a8] sm:$0xff]
    %v767 = vld [vmem:[#allocation2 + $0x1b0] sm:$0xff]
    %v768 = vld [vmem:[#allocation2 + $0x1b8] sm:$0xff]
    %v769 = vld [vmem:[#allocation2 + $0x1c0] sm:$0xff]
    %v770 = vld [vmem:[#allocation2 + $0x1c8] sm:$0xff]
    %v771 = vld [vmem:[#allocation2 + $0x1d0] sm:$0xff]
    %v772 = vld [vmem:[#allocation2 + $0x1d8] sm:$0xff]
    %v773 = vld [vmem:[#allocation2 + $0x1e0] sm:$0xff]
    %v774 = vld [vmem:[#allocation2 + $0x1e8] sm:$0xff]
    %v775 = vld [vmem:[#allocation2 + $0x1f0] sm:$0xff]
    %v776 = vld [vmem:[#allocation2 + $0x1f8] sm:$0xff]
    %v777 = vld [vmem:[#allocation2 + $0x200] sm:$0xff]
    %v778 = vld [vmem:[#allocation2 + $0x208] sm:$0xff]
    %v779 = vld [vmem:[#allocation2 + $0x210] sm:$0xff]
    %v780 = vld [vmem:[#allocation2 + $0x218] sm:$0xff]
    %v781 = vld [vmem:[#allocation2 + $0x220] sm:$0xff]
    %v782 = vld [vmem:[#allocation2 + $0x228] sm:$0xff]
    %v783 = vld [vmem:[#allocation2 + $0x230] sm:$0xff]
    %v784 = vld [vmem:[#allocation2 + $0x238] sm:$0xff]
    %v785 = vld [vmem:[#allocation2 + $0x240] sm:$0xff]
    %v786 = vld [vmem:[#allocation2 + $0x248] sm:$0xff]
    %v787 = vld [vmem:[#allocation2 + $0x250] sm:$0xff]
    %v788 = vld [vmem:[#allocation2 + $0x258] sm:$0xff]
    %v789 = vld [vmem:[#allocation2 + $0x260] sm:$0xff]
    %v790 = vld [vmem:[#allocation2 + $0x268] sm:$0xff]
    %v791 = vld [vmem:[#allocation2 + $0x270] sm:$0xff]
    %v792 = vld [vmem:[#allocation2 + $0x278] sm:$0xff]
    %v793 = vld [vmem:[#allocation2 + $0x280] sm:$0xff]
    %v794 = vld [vmem:[#allocation2 + $0x288] sm:$0xff]
    %v795 = vld [vmem:[#allocation2 + $0x290] sm:$0xff]
    %v796 = vld [vmem:[#allocation2 + $0x298] sm:$0xff]
    %v797 = vld [vmem:[#allocation2 + $0x2a0] sm:$0xff]
    %v798 = vld [vmem:[#allocation2 + $0x2a8] sm:$0xff]
    %v799 = vld [vmem:[#allocation2 + $0x2b0] sm:$0xff]
    %v800 = vld [vmem:[#allocation2 + $0x2b8] sm:$0xff]
    %v801 = vld [vmem:[#allocation2 + $0x2c0] sm:$0xff]
    %v802 = vld [vmem:[#allocation2 + $0x2c8] sm:$0xff]
    %v803 = vld [vmem:[#allocation2 + $0x2d0] sm:$0xff]
    %v804 = vld [vmem:[#allocation2 + $0x2d8] sm:$0xff]
    %v805 = vld [vmem:[#allocation2 + $0x2e0] sm:$0xff]
    %v806 = vld [vmem:[#allocation2 + $0x2e8] sm:$0xff]
    %v807 = vld [vmem:[#allocation2 + $0x2f0] sm:$0xff]
    %v808 = vld [vmem:[#allocation2 + $0x2f8] sm:$0xff]
    %v809 = vld [vmem:[#allocation2 + $0x300] sm:$0xff]
    %v810 = vld [vmem:[#allocation2 + $0x308] sm:$0xff]
    %v811 = vld [vmem:[#allocation2 + $0x310] sm:$0xff]
    %v812 = vld [vmem:[#allocation2 + $0x318] sm:$0xff]
    %v813 = vld [vmem:[#allocation2 + $0x320] sm:$0xff]
    %v814 = vld [vmem:[#allocation2 + $0x328] sm:$0xff]
    %v815 = vld [vmem:[#allocation2 + $0x330] sm:$0xff]
    %v816 = vld [vmem:[#allocation2 + $0x338] sm:$0xff]
    %v817 = vld [vmem:[#allocation2 + $0x340] sm:$0xff]
    %v818 = vld [vmem:[#allocation2 + $0x348] sm:$0xff]
    %v819 = vld [vmem:[#allocation2 + $0x350] sm:$0xff]
    %v820 = vld [vmem:[#allocation2 + $0x358] sm:$0xff]
    %v821 = vld [vmem:[#allocation2 + $0x360] sm:$0xff]
    %v822 = vld [vmem:[#allocation2 + $0x368] sm:$0xff]
    %v823 = vld [vmem:[#allocation2 + $0x370] sm:$0xff]
    %v824 = vld [vmem:[#allocation2 + $0x378] sm:$0xff]
    %v825 = vld [vmem:[#allocation2 + $0x380] sm:$0xff]
    %v826 = vld [vmem:[#allocation2 + $0x388] sm:$0xff]
    %v827 = vld [vmem:[#allocation2 + $0x390] sm:$0xff]
    %v828 = vld [vmem:[#allocation2 + $0x398] sm:$0xff]
    %v829 = vld [vmem:[#allocation2 + $0x3a0] sm:$0xff]
    %v830 = vld [vmem:[#allocation2 + $0x3a8] sm:$0xff]
    %v831 = vld [vmem:[#allocation2 + $0x3b0] sm:$0xff]
    %v832 = vld [vmem:[#allocation2 + $0x3b8] sm:$0xff]
    %v833 = vld [vmem:[#allocation2 + $0x3c0] sm:$0xff]
    %v834 = vld [vmem:[#allocation2 + $0x3c8] sm:$0xff]
    %v835 = vld [vmem:[#allocation2 + $0x3d0] sm:$0xff]
    %v836 = vld [vmem:[#allocation2 + $0x3d8] sm:$0xff]
    %v837 = vld [vmem:[#allocation2 + $0x3e0] sm:$0xff]
    %v838 = vld [vmem:[#allocation2 + $0x3e8] sm:$0xff]
    %v839 = vld [vmem:[#allocation2 + $0x3f0] sm:$0xff]
    %v840 = vld [vmem:[#allocation2 + $0x3f8] sm:$0xff]
    %v841 = vld [vmem:[%s6] sm:$0xf]
    %v843 = vlaneseq
    %v844 = vshrl.u32 %v843, 7
    %v845 = vsub.s32 0, %v844
    %v846 = vrot.slane %v841, %v845
    %v847 = vlaneseq
    %v848 = vshrl.u32 %v847, 7
    %v849 = vsub.s32 1, %v848
    %v850 = vrot.slane %v841, %v849
    %v851 = vlaneseq
    %v852 = vshrl.u32 %v851, 7
    %v853 = vsub.s32 2, %v852
    %v854 = vrot.slane %v841, %v853
    %v855 = vlaneseq
    %v856 = vshrl.u32 %v855, 7
    %v857 = vsub.s32 3, %v856
    %v858 = vrot.slane %v841, %v857
    %v991 = vunpack.c.l.b16 %v713
    %v992 = vunpack.c.h.b16 %v713
    %v993 = vunpack.c.l.b16 %v714
    %v994 = vunpack.c.h.b16 %v714
    %v995 = vunpack.c.l.b16 %v715
    %v996 = vunpack.c.h.b16 %v715
    %v997 = vunpack.c.l.b16 %v716
    %v998 = vunpack.c.h.b16 %v716
    %v999 = vunpack.c.l.b16 %v717
    %v1000 = vunpack.c.h.b16 %v717
    %v1001 = vunpack.c.l.b16 %v718
    %v1002 = vunpack.c.h.b16 %v718
    %v1003 = vunpack.c.l.b16 %v719
    %v1004 = vunpack.c.h.b16 %v719
    %v1005 = vunpack.c.l.b16 %v720
    %v1006 = vunpack.c.h.b16 %v720
    %v1007 = vunpack.c.l.b16 %v721
    %v1008 = vunpack.c.h.b16 %v721
    %v1009 = vunpack.c.l.b16 %v722
    %v1010 = vunpack.c.h.b16 %v722
    %v1011 = vunpack.c.l.b16 %v723
    %v1012 = vunpack.c.h.b16 %v723
    %v1013 = vunpack.c.l.b16 %v724
    %v1014 = vunpack.c.h.b16 %v724
    %v1015 = vunpack.c.l.b16 %v725
    %v1016 = vunpack.c.h.b16 %v725
    %v1017 = vunpack.c.l.b16 %v726
    %v1018 = vunpack.c.h.b16 %v726
    %v1019 = vunpack.c.l.b16 %v727
    %v1020 = vunpack.c.h.b16 %v727
    %v1021 = vunpack.c.l.b16 %v728
    %v1022 = vunpack.c.h.b16 %v728
    %v1023 = vunpack.c.l.b16 %v729
    %v1024 = vunpack.c.h.b16 %v729
    %v1025 = vunpack.c.l.b16 %v730
    %v1026 = vunpack.c.h.b16 %v730
    %v1027 = vunpack.c.l.b16 %v731
    %v1028 = vunpack.c.h.b16 %v731
    %v1029 = vunpack.c.l.b16 %v732
    %v1030 = vunpack.c.h.b16 %v732
    %v1031 = vunpack.c.l.b16 %v733
    %v1032 = vunpack.c.h.b16 %v733
    %v1033 = vunpack.c.l.b16 %v734
    %v1034 = vunpack.c.h.b16 %v734
    %v1035 = vunpack.c.l.b16 %v735
    %v1036 = vunpack.c.h.b16 %v735
    %v1037 = vunpack.c.l.b16 %v736
    %v1038 = vunpack.c.h.b16 %v736
    %v1039 = vunpack.c.l.b16 %v737
    %v1040 = vunpack.c.h.b16 %v737
    %v1041 = vunpack.c.l.b16 %v738
    %v1042 = vunpack.c.h.b16 %v738
    %v1043 = vunpack.c.l.b16 %v739
    %v1044 = vunpack.c.h.b16 %v739
    %v1045 = vunpack.c.l.b16 %v740
    %v1046 = vunpack.c.h.b16 %v740
    %v1047 = vunpack.c.l.b16 %v741
    %v1048 = vunpack.c.h.b16 %v741
    %v1049 = vunpack.c.l.b16 %v742
    %v1050 = vunpack.c.h.b16 %v742
    %v1051 = vunpack.c.l.b16 %v743
    %v1052 = vunpack.c.h.b16 %v743
    %v1053 = vunpack.c.l.b16 %v744
    %v1054 = vunpack.c.h.b16 %v744
    %v1055 = vunpack.c.l.b16 %v745
    %v1056 = vunpack.c.h.b16 %v745
    %v1057 = vunpack.c.l.b16 %v746
    %v1058 = vunpack.c.h.b16 %v746
    %v1059 = vunpack.c.l.b16 %v747
    %v1060 = vunpack.c.h.b16 %v747
    %v1061 = vunpack.c.l.b16 %v748
    %v1062 = vunpack.c.h.b16 %v748
    %v1063 = vunpack.c.l.b16 %v749
    %v1064 = vunpack.c.h.b16 %v749
    %v1065 = vunpack.c.l.b16 %v750
    %v1066 = vunpack.c.h.b16 %v750
    %v1067 = vunpack.c.l.b16 %v751
    %v1068 = vunpack.c.h.b16 %v751
    %v1069 = vunpack.c.l.b16 %v752
    %v1070 = vunpack.c.h.b16 %v752
    %v1071 = vunpack.c.l.b16 %v753
    %v1072 = vunpack.c.h.b16 %v753
    %v1073 = vunpack.c.l.b16 %v754
    %v1074 = vunpack.c.h.b16 %v754
    %v1075 = vunpack.c.l.b16 %v755
    %v1076 = vunpack.c.h.b16 %v755
    %v1077 = vunpack.c.l.b16 %v756
    %v1078 = vunpack.c.h.b16 %v756
    %v1079 = vunpack.c.l.b16 %v757
    %v1080 = vunpack.c.h.b16 %v757
    %v1081 = vunpack.c.l.b16 %v758
    %v1082 = vunpack.c.h.b16 %v758
    %v1083 = vunpack.c.l.b16 %v759
    %v1084 = vunpack.c.h.b16 %v759
    %v1085 = vunpack.c.l.b16 %v760
    %v1086 = vunpack.c.h.b16 %v760
    %v1087 = vunpack.c.l.b16 %v761
    %v1088 = vunpack.c.h.b16 %v761
    %v1089 = vunpack.c.l.b16 %v762
    %v1090 = vunpack.c.h.b16 %v762
    %v1091 = vunpack.c.l.b16 %v763
    %v1092 = vunpack.c.h.b16 %v763
    %v1093 = vunpack.c.l.b16 %v764
    %v1094 = vunpack.c.h.b16 %v764
    %v1095 = vunpack.c.l.b16 %v765
    %v1096 = vunpack.c.h.b16 %v765
    %v1097 = vunpack.c.l.b16 %v766
    %v1098 = vunpack.c.h.b16 %v766
    %v1099 = vunpack.c.l.b16 %v767
    %v1100 = vunpack.c.h.b16 %v767
    %v1101 = vunpack.c.l.b16 %v768
    %v1102 = vunpack.c.h.b16 %v768
    %v1103 = vunpack.c.l.b16 %v769
    %v1104 = vunpack.c.h.b16 %v769
    %v1105 = vunpack.c.l.b16 %v770
    %v1106 = vunpack.c.h.b16 %v770
    %v1107 = vunpack.c.l.b16 %v771
    %v1108 = vunpack.c.h.b16 %v771
    %v1109 = vunpack.c.l.b16 %v772
    %v1110 = vunpack.c.h.b16 %v772
    %v1111 = vunpack.c.l.b16 %v773
    %v1112 = vunpack.c.h.b16 %v773
    %v1113 = vunpack.c.l.b16 %v774
    %v1114 = vunpack.c.h.b16 %v774
    %v1115 = vunpack.c.l.b16 %v775
    %v1116 = vunpack.c.h.b16 %v775
    %v1117 = vunpack.c.l.b16 %v776
    %v1118 = vunpack.c.h.b16 %v776
    %v1119 = vunpack.c.l.b16 %v777
    %v1120 = vunpack.c.h.b16 %v777
    %v1121 = vunpack.c.l.b16 %v778
    %v1122 = vunpack.c.h.b16 %v778
    %v1123 = vunpack.c.l.b16 %v779
    %v1124 = vunpack.c.h.b16 %v779
    %v1125 = vunpack.c.l.b16 %v780
    %v1126 = vunpack.c.h.b16 %v780
    %v1127 = vunpack.c.l.b16 %v781
    %v1128 = vunpack.c.h.b16 %v781
    %v1129 = vunpack.c.l.b16 %v782
    %v1130 = vunpack.c.h.b16 %v782
    %v1131 = vunpack.c.l.b16 %v783
    %v1132 = vunpack.c.h.b16 %v783
    %v1133 = vunpack.c.l.b16 %v784
    %v1134 = vunpack.c.h.b16 %v784
    %v1135 = vunpack.c.l.b16 %v785
    %v1136 = vunpack.c.h.b16 %v785
    %v1137 = vunpack.c.l.b16 %v786
    %v1138 = vunpack.c.h.b16 %v786
    %v1139 = vunpack.c.l.b16 %v787
    %v1140 = vunpack.c.h.b16 %v787
    %v1141 = vunpack.c.l.b16 %v788
    %v1142 = vunpack.c.h.b16 %v788
    %v1143 = vunpack.c.l.b16 %v789
    %v1144 = vunpack.c.h.b16 %v789
    %v1145 = vunpack.c.l.b16 %v790
    %v1146 = vunpack.c.h.b16 %v790
    %v1147 = vunpack.c.l.b16 %v791
    %v1148 = vunpack.c.h.b16 %v791
    %v1149 = vunpack.c.l.b16 %v792
    %v1150 = vunpack.c.h.b16 %v792
    %v1151 = vunpack.c.l.b16 %v793
    %v1152 = vunpack.c.h.b16 %v793
    %v1153 = vunpack.c.l.b16 %v794
    %v1154 = vunpack.c.h.b16 %v794
    %v1155 = vunpack.c.l.b16 %v795
    %v1156 = vunpack.c.h.b16 %v795
    %v1157 = vunpack.c.l.b16 %v796
    %v1158 = vunpack.c.h.b16 %v796
    %v1159 = vunpack.c.l.b16 %v797
    %v1160 = vunpack.c.h.b16 %v797
    %v1161 = vunpack.c.l.b16 %v798
    %v1162 = vunpack.c.h.b16 %v798
    %v1163 = vunpack.c.l.b16 %v799
    %v1164 = vunpack.c.h.b16 %v799
    %v1165 = vunpack.c.l.b16 %v800
    %v1166 = vunpack.c.h.b16 %v800
    %v1167 = vunpack.c.l.b16 %v801
    %v1168 = vunpack.c.h.b16 %v801
    %v1169 = vunpack.c.l.b16 %v802
    %v1170 = vunpack.c.h.b16 %v802
    %v1171 = vunpack.c.l.b16 %v803
    %v1172 = vunpack.c.h.b16 %v803
    %v1173 = vunpack.c.l.b16 %v804
    %v1174 = vunpack.c.h.b16 %v804
    %v1175 = vunpack.c.l.b16 %v805
    %v1176 = vunpack.c.h.b16 %v805
    %v1177 = vunpack.c.l.b16 %v806
    %v1178 = vunpack.c.h.b16 %v806
    %v1179 = vunpack.c.l.b16 %v807
    %v1180 = vunpack.c.h.b16 %v807
    %v1181 = vunpack.c.l.b16 %v808
    %v1182 = vunpack.c.h.b16 %v808
    %v1183 = vunpack.c.l.b16 %v809
    %v1184 = vunpack.c.h.b16 %v809
    %v1185 = vunpack.c.l.b16 %v810
    %v1186 = vunpack.c.h.b16 %v810
    %v1187 = vunpack.c.l.b16 %v811
    %v1188 = vunpack.c.h.b16 %v811
    %v1189 = vunpack.c.l.b16 %v812
    %v1190 = vunpack.c.h.b16 %v812
    %v1191 = vunpack.c.l.b16 %v813
    %v1192 = vunpack.c.h.b16 %v813
    %v1193 = vunpack.c.l.b16 %v814
    %v1194 = vunpack.c.h.b16 %v814
    %v1195 = vunpack.c.l.b16 %v815
    %v1196 = vunpack.c.h.b16 %v815
    %v1197 = vunpack.c.l.b16 %v816
    %v1198 = vunpack.c.h.b16 %v816
    %v1199 = vunpack.c.l.b16 %v817
    %v1200 = vunpack.c.h.b16 %v817
    %v1201 = vunpack.c.l.b16 %v818
    %v1202 = vunpack.c.h.b16 %v818
    %v1203 = vunpack.c.l.b16 %v819
    %v1204 = vunpack.c.h.b16 %v819
    %v1205 = vunpack.c.l.b16 %v820
    %v1206 = vunpack.c.h.b16 %v820
    %v1207 = vunpack.c.l.b16 %v821
    %v1208 = vunpack.c.h.b16 %v821
    %v1209 = vunpack.c.l.b16 %v822
    %v1210 = vunpack.c.h.b16 %v822
    %v1211 = vunpack.c.l.b16 %v823
    %v1212 = vunpack.c.h.b16 %v823
    %v1213 = vunpack.c.l.b16 %v824
    %v1214 = vunpack.c.h.b16 %v824
    %v1215 = vunpack.c.l.b16 %v825
    %v1216 = vunpack.c.h.b16 %v825
    %v1217 = vunpack.c.l.b16 %v826
    %v1218 = vunpack.c.h.b16 %v826
    %v1219 = vunpack.c.l.b16 %v827
    %v1220 = vunpack.c.h.b16 %v827
    %v1221 = vunpack.c.l.b16 %v828
    %v1222 = vunpack.c.h.b16 %v828
    %v1223 = vunpack.c.l.b16 %v829
    %v1224 = vunpack.c.h.b16 %v829
    %v1225 = vunpack.c.l.b16 %v830
    %v1226 = vunpack.c.h.b16 %v830
    %v1227 = vunpack.c.l.b16 %v831
    %v1228 = vunpack.c.h.b16 %v831
    %v1229 = vunpack.c.l.b16 %v832
    %v1230 = vunpack.c.h.b16 %v832
    %v1231 = vunpack.c.l.b16 %v833
    %v1232 = vunpack.c.h.b16 %v833
    %v1233 = vunpack.c.l.b16 %v834
    %v1234 = vunpack.c.h.b16 %v834
    %v1235 = vunpack.c.l.b16 %v835
    %v1236 = vunpack.c.h.b16 %v835
    %v1237 = vunpack.c.l.b16 %v836
    %v1238 = vunpack.c.h.b16 %v836
    %v1239 = vunpack.c.l.b16 %v837
    %v1240 = vunpack.c.h.b16 %v837
    %v1241 = vunpack.c.l.b16 %v838
    %v1242 = vunpack.c.h.b16 %v838
    %v1243 = vunpack.c.l.b16 %v839
    %v1244 = vunpack.c.h.b16 %v839
    %v1245 = vunpack.c.l.b16 %v840
    %v1246 = vunpack.c.h.b16 %v840
    %v1247 = vpack.c.b16 %v995, %v991
    %v1248 = vpack.c.b16 %v996, %v992
    %v1249 = vpack.c.b16 %v997, %v993
    %v1250 = vpack.c.b16 %v998, %v994
    %v1251 = vpack.c.b16 %v1003, %v999
    %v1252 = vpack.c.b16 %v1004, %v1000
    %v1253 = vpack.c.b16 %v1005, %v1001
    %v1254 = vpack.c.b16 %v1006, %v1002
    %v1255 = vpack.c.b16 %v1011, %v1007
    %v1256 = vpack.c.b16 %v1012, %v1008
    %v1257 = vpack.c.b16 %v1013, %v1009
    %v1258 = vpack.c.b16 %v1014, %v1010
    %v1259 = vpack.c.b16 %v1019, %v1015
    %v1260 = vpack.c.b16 %v1020, %v1016
    %v1261 = vpack.c.b16 %v1021, %v1017
    %v1262 = vpack.c.b16 %v1022, %v1018
    %v1263 = vpack.c.b16 %v1027, %v1023
    %v1264 = vpack.c.b16 %v1028, %v1024
    %v1265 = vpack.c.b16 %v1029, %v1025
    %v1266 = vpack.c.b16 %v1030, %v1026
    %v1267 = vpack.c.b16 %v1035, %v1031
    %v1268 = vpack.c.b16 %v1036, %v1032
    %v1269 = vpack.c.b16 %v1037, %v1033
    %v1270 = vpack.c.b16 %v1038, %v1034
    %v1271 = vpack.c.b16 %v1043, %v1039
    %v1272 = vpack.c.b16 %v1044, %v1040
    %v1273 = vpack.c.b16 %v1045, %v1041
    %v1274 = vpack.c.b16 %v1046, %v1042
    %v1275 = vpack.c.b16 %v1051, %v1047
    %v1276 = vpack.c.b16 %v1052, %v1048
    %v1277 = vpack.c.b16 %v1053, %v1049
    %v1278 = vpack.c.b16 %v1054, %v1050
    %v1279 = vpack.c.b16 %v1059, %v1055
    %v1280 = vpack.c.b16 %v1060, %v1056
    %v1281 = vpack.c.b16 %v1061, %v1057
    %v1282 = vpack.c.b16 %v1062, %v1058
    %v1283 = vpack.c.b16 %v1067, %v1063
    %v1284 = vpack.c.b16 %v1068, %v1064
    %v1285 = vpack.c.b16 %v1069, %v1065
    %v1286 = vpack.c.b16 %v1070, %v1066
    %v1287 = vpack.c.b16 %v1075, %v1071
    %v1288 = vpack.c.b16 %v1076, %v1072
    %v1289 = vpack.c.b16 %v1077, %v1073
    %v1290 = vpack.c.b16 %v1078, %v1074
    %v1291 = vpack.c.b16 %v1083, %v1079
    %v1292 = vpack.c.b16 %v1084, %v1080
    %v1293 = vpack.c.b16 %v1085, %v1081
    %v1294 = vpack.c.b16 %v1086, %v1082
    %v1295 = vpack.c.b16 %v1091, %v1087
    %v1296 = vpack.c.b16 %v1092, %v1088
    %v1297 = vpack.c.b16 %v1093, %v1089
    %v1298 = vpack.c.b16 %v1094, %v1090
    %v1299 = vpack.c.b16 %v1099, %v1095
    %v1300 = vpack.c.b16 %v1100, %v1096
    %v1301 = vpack.c.b16 %v1101, %v1097
    %v1302 = vpack.c.b16 %v1102, %v1098
    %v1303 = vpack.c.b16 %v1107, %v1103
    %v1304 = vpack.c.b16 %v1108, %v1104
    %v1305 = vpack.c.b16 %v1109, %v1105
    %v1306 = vpack.c.b16 %v1110, %v1106
    %v1307 = vpack.c.b16 %v1115, %v1111
    %v1308 = vpack.c.b16 %v1116, %v1112
    %v1309 = vpack.c.b16 %v1117, %v1113
    %v1310 = vpack.c.b16 %v1118, %v1114
    %v1311 = vpack.c.b16 %v1123, %v1119
    %v1312 = vpack.c.b16 %v1124, %v1120
    %v1313 = vpack.c.b16 %v1125, %v1121
    %v1314 = vpack.c.b16 %v1126, %v1122
    %v1315 = vpack.c.b16 %v1131, %v1127
    %v1316 = vpack.c.b16 %v1132, %v1128
    %v1317 = vpack.c.b16 %v1133, %v1129
    %v1318 = vpack.c.b16 %v1134, %v1130
    %v1319 = vpack.c.b16 %v1139, %v1135
    %v1320 = vpack.c.b16 %v1140, %v1136
    %v1321 = vpack.c.b16 %v1141, %v1137
    %v1322 = vpack.c.b16 %v1142, %v1138
    %v1323 = vpack.c.b16 %v1147, %v1143
    %v1324 = vpack.c.b16 %v1148, %v1144
    %v1325 = vpack.c.b16 %v1149, %v1145
    %v1326 = vpack.c.b16 %v1150, %v1146
    %v1327 = vpack.c.b16 %v1155, %v1151
    %v1328 = vpack.c.b16 %v1156, %v1152
    %v1329 = vpack.c.b16 %v1157, %v1153
    %v1330 = vpack.c.b16 %v1158, %v1154
    %v1331 = vpack.c.b16 %v1163, %v1159
    %v1332 = vpack.c.b16 %v1164, %v1160
    %v1333 = vpack.c.b16 %v1165, %v1161
    %v1334 = vpack.c.b16 %v1166, %v1162
    %v1335 = vpack.c.b16 %v1171, %v1167
    %v1336 = vpack.c.b16 %v1172, %v1168
    %v1337 = vpack.c.b16 %v1173, %v1169
    %v1338 = vpack.c.b16 %v1174, %v1170
    %v1339 = vpack.c.b16 %v1179, %v1175
    %v1340 = vpack.c.b16 %v1180, %v1176
    %v1341 = vpack.c.b16 %v1181, %v1177
    %v1342 = vpack.c.b16 %v1182, %v1178
    %v1343 = vpack.c.b16 %v1187, %v1183
    %v1344 = vpack.c.b16 %v1188, %v1184
    %v1345 = vpack.c.b16 %v1189, %v1185
    %v1346 = vpack.c.b16 %v1190, %v1186
    %v1347 = vpack.c.b16 %v1195, %v1191
    %v1348 = vpack.c.b16 %v1196, %v1192
    %v1349 = vpack.c.b16 %v1197, %v1193
    %v1350 = vpack.c.b16 %v1198, %v1194
    %v1351 = vpack.c.b16 %v1203, %v1199
    %v1352 = vpack.c.b16 %v1204, %v1200
    %v1353 = vpack.c.b16 %v1205, %v1201
    %v1354 = vpack.c.b16 %v1206, %v1202
    %v1355 = vpack.c.b16 %v1211, %v1207
    %v1356 = vpack.c.b16 %v1212, %v1208
    %v1357 = vpack.c.b16 %v1213, %v1209
    %v1358 = vpack.c.b16 %v1214, %v1210
    %v1359 = vpack.c.b16 %v1219, %v1215
    %v1360 = vpack.c.b16 %v1220, %v1216
    %v1361 = vpack.c.b16 %v1221, %v1217
    %v1362 = vpack.c.b16 %v1222, %v1218
    %v1363 = vpack.c.b16 %v1227, %v1223
    %v1364 = vpack.c.b16 %v1228, %v1224
    %v1365 = vpack.c.b16 %v1229, %v1225
    %v1366 = vpack.c.b16 %v1230, %v1226
    %v1367 = vpack.c.b16 %v1235, %v1231
    %v1368 = vpack.c.b16 %v1236, %v1232
    %v1369 = vpack.c.b16 %v1237, %v1233
    %v1370 = vpack.c.b16 %v1238, %v1234
    %v1371 = vpack.c.b16 %v1243, %v1239
    %v1372 = vpack.c.b16 %v1244, %v1240
    %v1373 = vpack.c.b16 %v1245, %v1241
    %v1374 = vpack.c.b16 %v1246, %v1242
    %1503 = vmatprep.subr.bf16.mxu0 %v1248
    %1504 = vmatpush1.bf16.msra.mxu0 %v1247
    %1505 = vmatprep.subr.bf16.mxu0 %v1252
    %1506 = vmatpush1.bf16.msra.mxu0 %v1251
    %1507 = vmatprep.subr.bf16.mxu0 %v1256
    %1508 = vmatpush1.bf16.msra.mxu0 %v1255
    %1509 = vmatprep.subr.bf16.mxu0 %v1260
    %1510 = vmatpush1.bf16.msra.mxu0 %v1259
    %1511 = vmatprep.subr.bf16.mxu0 %v1264
    %1512 = vmatpush1.bf16.msra.mxu0 %v1263
    %1513 = vmatprep.subr.bf16.mxu0 %v1268
    %1514 = vmatpush1.bf16.msra.mxu0 %v1267
    %1515 = vmatprep.subr.bf16.mxu0 %v1272
    %1516 = vmatpush1.bf16.msra.mxu0 %v1271
    %1517 = vmatprep.subr.bf16.mxu0 %v1276
    %1518 = vmatpush1.bf16.msra.mxu0 %v1275
    %1519 = vmatprep.subr.bf16.mxu0 %v1280
    %1520 = vmatpush1.bf16.msra.mxu0 %v1279
    %1521 = vmatprep.subr.bf16.mxu0 %v1284
    %1522 = vmatpush1.bf16.msra.mxu0 %v1283
    %1523 = vmatprep.subr.bf16.mxu0 %v1288
    %1524 = vmatpush1.bf16.msra.mxu0 %v1287
    %1525 = vmatprep.subr.bf16.mxu0 %v1292
    %1526 = vmatpush1.bf16.msra.mxu0 %v1291
    %1527 = vmatprep.subr.bf16.mxu0 %v1296
    %1528 = vmatpush1.bf16.msra.mxu0 %v1295
    %1529 = vmatprep.subr.bf16.mxu0 %v1300
    %1530 = vmatpush1.bf16.msra.mxu0 %v1299
    %1531 = vmatprep.subr.bf16.mxu0 %v1304
    %1532 = vmatpush1.bf16.msra.mxu0 %v1303
    %1533 = vmatprep.subr.bf16.mxu0 %v1308
    %1534 = vmatpush1.bf16.msra.mxu0 %v1307
    %1535 = vmatprep.mubr.bf16.mxu0 %v710
    %1536 = vmatmul.mubr.bf16.gmra.mrb[0].mxu0 %v709
    %v1537 = vpop.f32.mrb[0].mxu0
    %v1538 = vadd.f32 %v846, %v1537
    %v1539 = vpop.f32.mrb[0].mxu0
    %v1540 = vadd.f32 %v850, %v1539
    %v1541 = vpop.f32.mrb[0].mxu0
    %v1542 = vpop.f32.mrb[0].mxu0
    %1543 = vdwg.mxu0
    %1544 = vmatprep.subr.bf16.mxu0 %v1312
    %1545 = vmatpush1.bf16.msra.mxu0 %v1311
    %1546 = vmatprep.subr.bf16.mxu0 %v1316
    %1547 = vmatpush1.bf16.msra.mxu0 %v1315
    %1548 = vmatprep.subr.bf16.mxu0 %v1320
    %1549 = vmatpush1.bf16.msra.mxu0 %v1319
    %1550 = vmatprep.subr.bf16.mxu0 %v1324
    %1551 = vmatpush1.bf16.msra.mxu0 %v1323
    %1552 = vmatprep.subr.bf16.mxu0 %v1328
    %1553 = vmatpush1.bf16.msra.mxu0 %v1327
    %1554 = vmatprep.subr.bf16.mxu0 %v1332
    %1555 = vmatpush1.bf16.msra.mxu0 %v1331
    %1556 = vmatprep.subr.bf16.mxu0 %v1336
    %1557 = vmatpush1.bf16.msra.mxu0 %v1335
    %1558 = vmatprep.subr.bf16.mxu0 %v1340
    %1559 = vmatpush1.bf16.msra.mxu0 %v1339
    %1560 = vmatprep.subr.bf16.mxu0 %v1344
    %1561 = vmatpush1.bf16.msra.mxu0 %v1343
    %1562 = vmatprep.subr.bf16.mxu0 %v1348
    %1563 = vmatpush1.bf16.msra.mxu0 %v1347
    %1564 = vmatprep.subr.bf16.mxu0 %v1352
    %1565 = vmatpush1.bf16.msra.mxu0 %v1351
    %1566 = vmatprep.subr.bf16.mxu0 %v1356
    %1567 = vmatpush1.bf16.msra.mxu0 %v1355
    %1568 = vmatprep.subr.bf16.mxu0 %v1360
    %1569 = vmatpush1.bf16.msra.mxu0 %v1359
    %1570 = vmatprep.subr.bf16.mxu0 %v1364
    %1571 = vmatpush1.bf16.msra.mxu0 %v1363
    %1572 = vmatprep.subr.bf16.mxu0 %v1368
    %1573 = vmatpush1.bf16.msra.mxu0 %v1367
    %1574 = vmatprep.subr.bf16.mxu0 %v1372
    %1575 = vmatpush1.bf16.msra.mxu0 %v1371
    %1576 = vmatprep.mubr.bf16.mxu0 %v712
    %1577 = vmatmul.mubr.bf16.gmra.mrb[0].mxu0 %v711
    %v1578 = vpop.f32.mrb[0].mxu0
    %v1579 = vadd.f32 %v1538, %v1578
    %v1580 = vpop.f32.mrb[0].mxu0
    %v1581 = vadd.f32 %v1540, %v1580
    %v1582 = vpop.f32.mrb[0].mxu0
    %v1583 = vpop.f32.mrb[0].mxu0
    %1584 = vdwg.mxu0
    %1585 = vmatprep.subr.bf16.mxu0 %v1250
    %1586 = vmatpush1.bf16.msra.mxu0 %v1249
    %1587 = vmatprep.subr.bf16.mxu0 %v1254
    %1588 = vmatpush1.bf16.msra.mxu0 %v1253
    %1589 = vmatprep.subr.bf16.mxu0 %v1258
    %1590 = vmatpush1.bf16.msra.mxu0 %v1257
    %1591 = vmatprep.subr.bf16.mxu0 %v1262
    %1592 = vmatpush1.bf16.msra.mxu0 %v1261
    %1593 = vmatprep.subr.bf16.mxu0 %v1266
    %1594 = vmatpush1.bf16.msra.mxu0 %v1265
    %1595 = vmatprep.subr.bf16.mxu0 %v1270
    %1596 = vmatpush1.bf16.msra.mxu0 %v1269
    %1597 = vmatprep.subr.bf16.mxu0 %v1274
    %1598 = vmatpush1.bf16.msra.mxu0 %v1273
    %1599 = vmatprep.subr.bf16.mxu0 %v1278
    %1600 = vmatpush1.bf16.msra.mxu0 %v1277
    %1601 = vmatprep.subr.bf16.mxu0 %v1282
    %1602 = vmatpush1.bf16.msra.mxu0 %v1281
    %1603 = vmatprep.subr.bf16.mxu0 %v1286
    %1604 = vmatpush1.bf16.msra.mxu0 %v1285
    %1605 = vmatprep.subr.bf16.mxu0 %v1290
    %1606 = vmatpush1.bf16.msra.mxu0 %v1289
    %1607 = vmatprep.subr.bf16.mxu0 %v1294
    %1608 = vmatpush1.bf16.msra.mxu0 %v1293
    %1609 = vmatprep.subr.bf16.mxu0 %v1298
    %1610 = vmatpush1.bf16.msra.mxu0 %v1297
    %1611 = vmatprep.subr.bf16.mxu0 %v1302
    %1612 = vmatpush1.bf16.msra.mxu0 %v1301
    %1613 = vmatprep.subr.bf16.mxu0 %v1306
    %1614 = vmatpush1.bf16.msra.mxu0 %v1305
    %1615 = vmatprep.subr.bf16.mxu0 %v1310
    %1616 = vmatpush1.bf16.msra.mxu0 %v1309
    %1617 = vmatprep.mubr.bf16.mxu0 %v710
    %1618 = vmatmul.mubr.bf16.gmra.mrb[0].mxu0 %v709
    %v1619 = vpop.f32.mrb[0].mxu0
    %v1620 = vadd.f32 %v854, %v1619
    %v1621 = vpop.f32.mrb[0].mxu0
    %v1622 = vadd.f32 %v858, %v1621
    %v1623 = vpop.f32.mrb[0].mxu0
    %v1624 = vpop.f32.mrb[0].mxu0
    %1625 = vdwg.mxu0
    %1626 = vmatprep.subr.bf16.mxu0 %v1314
    %1627 = vmatpush1.bf16.msra.mxu0 %v1313
    %1628 = vmatprep.subr.bf16.mxu0 %v1318
    %1629 = vmatpush1.bf16.msra.mxu0 %v1317
    %1630 = vmatprep.subr.bf16.mxu0 %v1322
    %1631 = vmatpush1.bf16.msra.mxu0 %v1321
    %1632 = vmatprep.subr.bf16.mxu0 %v1326
    %1633 = vmatpush1.bf16.msra.mxu0 %v1325
    %1634 = vmatprep.subr.bf16.mxu0 %v1330
    %1635 = vmatpush1.bf16.msra.mxu0 %v1329
    %1636 = vmatprep.subr.bf16.mxu0 %v1334
    %1637 = vmatpush1.bf16.msra.mxu0 %v1333
    %1638 = vmatprep.subr.bf16.mxu0 %v1338
    %1639 = vmatpush1.bf16.msra.mxu0 %v1337
    %1640 = vmatprep.subr.bf16.mxu0 %v1342
    %1641 = vmatpush1.bf16.msra.mxu0 %v1341
    %1642 = vmatprep.subr.bf16.mxu0 %v1346
    %1643 = vmatpush1.bf16.msra.mxu0 %v1345
    %1644 = vmatprep.subr.bf16.mxu0 %v1350
    %1645 = vmatpush1.bf16.msra.mxu0 %v1349
    %1646 = vmatprep.subr.bf16.mxu0 %v1354
    %1647 = vmatpush1.bf16.msra.mxu0 %v1353
    %1648 = vmatprep.subr.bf16.mxu0 %v1358
    %1649 = vmatpush1.bf16.msra.mxu0 %v1357
    %1650 = vmatprep.subr.bf16.mxu0 %v1362
    %1651 = vmatpush1.bf16.msra.mxu0 %v1361
    %1652 = vmatprep.subr.bf16.mxu0 %v1366
    %1653 = vmatpush1.bf16.msra.mxu0 %v1365
    %1654 = vmatprep.subr.bf16.mxu0 %v1370
    %1655 = vmatpush1.bf16.msra.mxu0 %v1369
    %1656 = vmatprep.subr.bf16.mxu0 %v1374
    %1657 = vmatpush1.bf16.msra.mxu0 %v1373
    %1658 = vmatprep.mubr.bf16.mxu0 %v712
    %1659 = vmatmul.mubr.bf16.gmra.mrb[0].mxu0 %v711
    %v1660 = vpop.f32.mrb[0].mxu0
    %v1661 = vadd.f32 %v1620, %v1660
    %v1662 = vpop.f32.mrb[0].mxu0
    %v1663 = vadd.f32 %v1622, %v1662
    %v1664 = vpop.f32.mrb[0].mxu0
    %v1665 = vpop.f32.mrb[0].mxu0
    %1666 = vdwg.mxu0
    %v1667 = vpack.c.bf16 %v1579, %v1579
    %v1668 = vpack.c.bf16 %v1581, %v1581
    %v1669 = vpack.c.bf16 %v1661, %v1661
    %v1670 = vpack.c.bf16 %v1663, %v1663
    %v1675 = vunpack.c.l.b16 %v1667
    %v1676 = vunpack.c.l.b16 %v1668
    %v1677 = vunpack.c.l.b16 %v1669
    %v1678 = vunpack.c.l.b16 %v1670
    %v1679 = vpack.c.b16 %v1676, %v1675
    %v1680 = vpack.c.b16 %v1678, %v1677
    %1683 = vst [vmem:[%s7] sm:$0xff] %v1679
    %1684 = vst [vmem:[%s7 + $0x8] sm:$0xff] %v1680
    %v1685 = vmul.f32 %v407, %v407
    %v1686 = vmul.f32 %v1685, 0.5
    %v1687 = vsub.f32 %v1686, 0.25
    %v1688 = vsel %vm404, 0.0, %v397
    %v1689 = vsub.f32 %v1687, %v1688
    %v1690 = vlaneseq
    %v1691 = vshrl.u32 %v1690, 7
    %s1692 = smul.u32 0, 8
    %v1693 = vstv %s1692
    %v1694 = vadd.s32 %v1691, %v1693
    %vm1695 = vcmp.lt.s32.totalorder %v1694, 2
    %v1696 = vsel %vm1695, 1, 0
    %vm1697 = vcmp.eq.s32.totalorder %v1696, 1
    %v1698 = vsel %vm1697, %v1689, 0.0
    %1699 = vadd.xlane.f32.xlu0 %v1698
    %v1700 = vpop.xlane.xlu0 %1699
    %v1701 = vrot.slane %v1700, 4
    %v1702 = vadd.f32 %v1700, %v1701
    %v1703 = vrot.slane %v1702, 2
    %v1704 = vadd.f32 %v1702, %v1703
    %v1705 = vrot.slane %v1704, 1
    %v1706 = vadd.f32 %v1704, %v1705
    %s1707 = vtos %v1706
    %v1708 = vstv %s1707
    %1709 = vst [vmem:[%s8] sm:$0x1] %v1708
    // Predicated region
    $region34: #{vae_forward.1} parent=1 // pred_check
      _
    $region35: #{vae_forward.1} parent=1 // pred_check_branch
      %1711 = sbr.rel (0) target = $region37
    $region36: #{vae_forward.1} parent=1 // pred_region
      _
    $region37: #{vae_forward.1} parent=1 // pred_fallthru
      _
    // Predicated region
    $region38: #{vae_forward.1} parent=1 // pred_check
      _
    $region39: #{vae_forward.1} parent=1 // pred_check_branch
      %1713 = sbr.rel (0) target = $region41
    $region40: #{vae_forward.1} parent=1 // pred_region
      _
    $region41: #{vae_forward.1} parent=1 // pred_fallthru
      _
    // Predicated region
    $region42: #{vae_forward.1} parent=1 // pred_check
      _
    $region43: #{vae_forward.1} parent=1 // pred_check_branch
      %1715 = sbr.rel (0) target = $region45
    $region44: #{vae_forward.1} parent=1 // pred_region
      _
    $region45: #{vae_forward.1} parent=1 // pred_fallthru
      _
    // Predicated region
    $region46: #{vae_forward.1} parent=1 // pred_check
      _
    $region47: #{vae_forward.1} parent=1 // pred_check_branch
      %1717 = sbr.rel (0) target = $region49
    $region48: #{vae_forward.1} parent=1 // pred_region
      _
    $region49: #{vae_forward.1} parent=1 // pred_fallthru
      _
    %1718 = vsyncpa [#allocation3], 1

</llo_original>
